<compile_context>
chip_gen: v7x
topology: tpu7x:2x2x1
jax: 0.10.0
libtpu: 0.0.40
codegen_flags: <defaults>
</compile_context>

<pallas_src>
import functools

import numpy as np
import jax
import jax.numpy as jnp
from jax.experimental import pallas as pl
from jax.experimental.pallas import tpu as pltpu

OUT_PAD = 128  # lane-dense logits width (sliced back to OUT outside the kernel)


def _round_up(n, m):
    return ((n + m - 1) // m) * m


# ---------------------------------------------------------------------------
# Pallas kernel: fused 3x3 conv (one K=KP matmul) -> bias+ReLU -> MXU pool -> FC
# ---------------------------------------------------------------------------
def _child_kernel(xblk_ref, wk_ref, bconv_ref, pool_ref, wfc_ref, bfc_ref,
                  out_ref):
    # xblk_ref : [KP, TB*LC]   bf16  prestacked (im2col) operand, TB batch elems
    # wk_ref   : [C2, KP]      bf16  conv weights, column k*Cp+c = w[c2,c,dh,dw]
    # bconv_ref: [C2, 1]       f32
    # pool_ref : [TB, TB*LC]   f32   block-diag rows of 1/(H*W) at valid lanes
    # wfc_ref  : [C2, OUT_PAD] f32
    # bfc_ref  : [1, OUT_PAD]  f32
    # out_ref  : [TB, OUT_PAD] f32
    #
    # One MXU matmul over all 9 taps and all channels; batch folded into N.
    conv = jnp.dot(wk_ref[...], xblk_ref[...],
                   preferred_element_type=jnp.float32)          # [C2, TB*LC]
    conv = jnp.maximum(conv + bconv_ref[...], 0.0)              # bias+ReLU (f32)

    # Global average pool as a trans_b MXU contraction (no activation transpose).
    pooled = jax.lax.dot_general(
        pool_ref[...], conv, (((1,), (1,)), ((), ())),
        preferred_element_type=jnp.float32)                     # [TB, C2]

    # Linear head -> one full unmasked [TB, 128] store.
    out_ref[...] = (jnp.dot(pooled, wfc_ref[...],
                            preferred_element_type=jnp.float32)
                    + bfc_ref[...])                             # [TB, OUT_PAD]


# ---------------------------------------------------------------------------
# Wrapper: the RevNet forward pass (child_net applied to x)
# ---------------------------------------------------------------------------
@functools.partial(jax.jit, static_argnames=("tb",))
def revnet_forward(x, wconv, bconv, wfc, bfc, *, tb=8):
    """
    x:     [B, C, H, W]    (self.x for B=1, or batched x as in train_child)
    wconv: [C2, C, 3, 3]   (torch Conv2d weight layout)
    bconv: [C2]
    wfc:   [OUT, C2]       (torch Linear weight layout, y = x @ W.T + b)
    bfc:   [OUT]
    returns logits [B, OUT]
    """
    f32, bf16 = jnp.float32, jnp.bfloat16
    b, c, h, w = x.shape
    c2 = wconv.shape[0]
    out_size = wfc.shape[0]
    assert out_size <= OUT_PAD

    hp, wp = h + 2, w + 2                 # spatially padded sizes
    l_flat = hp * wp                      # flattened padded length (e.g. 324)
    lc = _round_up(l_flat, 128)           # lane-aligned conv domain (e.g. 384)
    cp = _round_up(c, 8)                  # channels padded to a sublane tile
    kp = _round_up(9 * cp, 16)            # fused contraction depth (bf16-aligned)
    b_pad = _round_up(b, tb)              # batch padded to the batch-block size
    nblk = b_pad // tb
    tblc = tb * lc                        # MXU N dimension per grid step
    pad_front = wp + 1                    # >= |most negative tap shift|

    # --- input prep: batch/channel/spatial pad, flatten, zero-extend (tiny) ---
    xp = jnp.pad(x.astype(f32),
                 ((0, b_pad - b), (0, cp - c), (1, 1), (1, 1)))
    xf = xp.reshape(b_pad, cp, l_flat)
    lext = pad_front + (wp + 1) + lc
    xf_ext = jnp.pad(xf, ((0, 0), (0, 0),
                          (pad_front, lext - pad_front - l_flat)))

    # --- wrapper-side prestack (im2col-lite): 9 statically shifted slices ---
    taps = []
    for k in range(9):
        dh, dw = k // 3, k % 3
        start = pad_front + (dh - 1) * wp + (dw - 1)
        taps.append(xf_ext[:, :, start:start + lc])             # [Bp, Cp, LC]
    xst = jnp.stack(taps, axis=1).reshape(b_pad, 9 * cp, lc)    # [Bp, 9*Cp, LC]
    xst = jnp.pad(xst, ((0, 0), (0, kp - 9 * cp), (0, 0)))      # [Bp, KP, LC]
    # Fold TB batch elements into the lane (N) dimension of each grid block.
    xst = xst.reshape(nblk, tb, kp, lc).transpose(0, 2, 1, 3)
    xst = xst.reshape(nblk, kp, tblc).astype(bf16)              # [nblk, KP, TB*LC]

    # --- weight prep (layout only; all math stays in-kernel) ---
    wk = jnp.transpose(wconv.astype(f32), (0, 2, 3, 1)).reshape(c2, 9, c)
    wk = jnp.pad(wk, ((0, 0), (0, 0), (0, cp - c))).reshape(c2, 9 * cp)
    wk = jnp.pad(wk, ((0, 0), (0, kp - 9 * cp))).astype(bf16)   # [C2, KP]
    bconv_col = bconv.astype(f32).reshape(c2, 1)                # [C2, 1]
    wfc_pad = jnp.pad(wfc.astype(f32).T,
                      ((0, 0), (0, OUT_PAD - out_size)))        # [C2, OUT_PAD]
    bfc_pad = jnp.pad(bfc.astype(f32).reshape(1, out_size),
                      ((0, 0), (0, OUT_PAD - out_size)))        # [1, OUT_PAD]

    # --- constant block-diagonal pooling matrix: 1/(H*W) at valid positions ---
    pool_row = np.zeros((lc,), np.float32)
    for hh in range(h):
        q0 = (hh + 1) * wp + 1
        pool_row[q0:q0 + w] = 1.0 / (h * w)
    pool_np = np.zeros((tb, tblc), np.float32)
    for bb in range(tb):
        pool_np[bb, bb * lc:(bb + 1) * lc] = pool_row
    pool_t = jnp.asarray(pool_np)                               # [TB, TB*LC]

    flops = int(nblk * (2 * c2 * kp * tblc + 2 * tb * tblc * c2
                        + 2 * tb * c2 * OUT_PAD))
    bytes_accessed = int(2 * (xst.size + wk.size)
                         + 4 * (bconv_col.size + pool_t.size + wfc_pad.size
                                + bfc_pad.size + b_pad * OUT_PAD))

    out = pl.pallas_call(
        _child_kernel,
        out_shape=jax.ShapeDtypeStruct((b_pad, OUT_PAD), f32),
        grid=(nblk,),
        in_specs=[
            pl.BlockSpec((None, kp, tblc), lambda g: (g, 0, 0)),  # per-block input
            pl.BlockSpec((c2, kp), lambda g: (0, 0)),             # resident weights
            pl.BlockSpec((c2, 1), lambda g: (0, 0)),
            pl.BlockSpec((tb, tblc), lambda g: (0, 0)),
            pl.BlockSpec((c2, OUT_PAD), lambda g: (0, 0)),
            pl.BlockSpec((1, OUT_PAD), lambda g: (0, 0)),
        ],
        out_specs=pl.BlockSpec((tb, OUT_PAD), lambda g: (g, 0)),
        compiler_params=pltpu.CompilerParams(
            dimension_semantics=("parallel",)),
        cost_estimate=pl.CostEstimate(
            flops=flops, transcendentals=0, bytes_accessed=bytes_accessed),
    )(xst, wk, bconv_col, pool_t, wfc_pad, bfc_pad)

    return out[:b, :out_size]                                   # [B, OUT]


# ---------------------------------------------------------------------------
# Pure-JAX reference for correctness check
# ---------------------------------------------------------------------------
def revnet_forward_ref(x, wconv, bconv, wfc, bfc):
    conv = jax.lax.conv_general_dilated(
        x, wconv, window_strides=(1, 1), padding=((1, 1), (1, 1)),
        dimension_numbers=("NCHW", "OIHW", "NCHW"))
    conv = jax.nn.relu(conv + bconv[None, :, None, None])
    pooled = conv.mean(axis=(2, 3))                             # [B, C2]
    return pooled @ wfc.T + bfc[None, :]


if __name__ == "__main__":
    # RevNet config: input_shape = [4, 16, 16], output_size = 10.
    C, H, W = 4, 16, 16
    C2, OUT = 8, 10

    key = jax.random.PRNGKey(0)
    kxb, kx1, kwc, kbc, kwf, kbf = jax.random.split(key, 6)

    # Deterministic child_net parameters (synthetic, not a checkpoint load).
    wconv = jax.random.normal(kwc, (C2, C, 3, 3), dtype=jnp.float32) * 0.1
    bconv = jax.random.normal(kbc, (C2,), dtype=jnp.float32) * 0.1
    wfc = jax.random.normal(kwf, (OUT, C2), dtype=jnp.float32) * 0.1
    bfc = jax.random.normal(kbf, (OUT,), dtype=jnp.float32) * 0.1

    # Batched path (train_child): B=16 -> two grid steps of TB=8 (2 TC on v7x).
    xb = jax.random.normal(kxb, (16, C, H, W), dtype=jnp.float32)
    yb = jax.block_until_ready(revnet_forward(xb, wconv, bconv, wfc, bfc))
    yb_ref = revnet_forward_ref(xb, wconv, bconv, wfc, bfc)
    assert yb.shape == (16, OUT)
    assert jnp.allclose(yb, yb_ref, atol=1e-2, rtol=1e-2), (yb, yb_ref)

    # self.x path (forward with x=None): B=1 learnable input parameter.
    x1 = jax.random.normal(kx1, (1, C, H, W), dtype=jnp.float32)
    y1 = jax.block_until_ready(revnet_forward(x1, wconv, bconv, wfc, bfc))
    y1_ref = revnet_forward_ref(x1, wconv, bconv, wfc, bfc)
    assert y1.shape == (1, OUT)
    assert jnp.allclose(y1, y1_ref, atol=1e-2, rtol=1e-2), (y1, y1_ref)

    print("KERNEL_OK")
</pallas_src>

<mosaic_0001>
module attributes {stable_mosaic.version = 11 : i64} {
  func.func @_child_kernel(%arg0: i32, %arg1: memref<1x80x3072xbf16, #tpu.memory_space<vmem>>, %arg2: memref<8x80xbf16, #tpu.memory_space<vmem>>, %arg3: memref<8x1xf32, #tpu.memory_space<vmem>>, %arg4: memref<8x3072xf32, #tpu.memory_space<vmem>>, %arg5: memref<8x128xf32, #tpu.memory_space<vmem>>, %arg6: memref<1x128xf32, #tpu.memory_space<vmem>>, %arg7: memref<8x128xf32, #tpu.memory_space<vmem>>) attributes {dimension_semantics = [#tpu.dimension_semantics<parallel>], iteration_bounds = array<i64: 2>, scalar_prefetch = 0 : i64, scratch_operands = 0 : i64, tpu.core_type = #tpu.core_type<tc>, window_params = [{transform_indices = @transform_0, window_bounds = array<i64: 1, 80, 3072>}, {pipeline_mode = #tpu.pipeline_mode<synchronous>, transform_indices = @transform_1, window_bounds = array<i64: 8, 80>}, {pipeline_mode = #tpu.pipeline_mode<synchronous>, transform_indices = @transform_2, window_bounds = array<i64: 8, 1>}, {pipeline_mode = #tpu.pipeline_mode<synchronous>, transform_indices = @transform_3, window_bounds = array<i64: 8, 3072>}, {pipeline_mode = #tpu.pipeline_mode<synchronous>, transform_indices = @transform_4, window_bounds = array<i64: 8, 128>}, {pipeline_mode = #tpu.pipeline_mode<synchronous>, transform_indices = @transform_5, window_bounds = array<i64: 1, 128>}, {transform_indices = @transform_6, window_bounds = array<i64: 8, 128>}]} {
    %c0 = arith.constant 0 : index
    %c0_0 = arith.constant 0 : index
    %0 = vector.load %arg2[%c0, %c0_0] : memref<8x80xbf16, #tpu.memory_space<vmem>>, vector<8x80xbf16>
    %c0_1 = arith.constant 0 : index
    %c0_2 = arith.constant 0 : index
    %c0_3 = arith.constant 0 : index
    %1 = vector.load %arg1[%c0_1, %c0_2, %c0_3] : memref<1x80x3072xbf16, #tpu.memory_space<vmem>>, vector<1x80x3072xbf16>
    %2 = vector.shape_cast %1 : vector<1x80x3072xbf16> to vector<80x3072xbf16>
    %cst = arith.constant dense<0.000000e+00> : vector<8x3072xf32>
    %3 = tpu.matmul %0, %2, %cst {dimension_numbers = #tpu.dot_dimension_numbers<[1], [0], [0], [1], [0, 0, 1, 1], [], []>} : vector<8x80xbf16>, vector<80x3072xbf16>, vector<8x3072xf32> -> vector<8x3072xf32>
    %c0_4 = arith.constant 0 : index
    %c0_5 = arith.constant 0 : index
    %4 = vector.load %arg3[%c0_4, %c0_5] : memref<8x1xf32, #tpu.memory_space<vmem>>, vector<8x1xf32>
    %5 = vector.broadcast %4 : vector<8x1xf32> to vector<8x3072xf32>
    %6 = arith.addf %3, %5 : vector<8x3072xf32>
    %cst_6 = arith.constant 0.000000e+00 : f32
    %7 = vector.broadcast %cst_6 : f32 to vector<8x3072xf32>
    %8 = arith.maximumf %6, %7 : vector<8x3072xf32>
    %c0_7 = arith.constant 0 : index
    %c0_8 = arith.constant 0 : index
    %9 = vector.load %arg4[%c0_7, %c0_8] : memref<8x3072xf32, #tpu.memory_space<vmem>>, vector<8x3072xf32>
    %cst_9 = arith.constant dense<0.000000e+00> : vector<8x8xf32>
    %10 = tpu.matmul %9, %8, %cst_9 {dimension_numbers = #tpu.dot_dimension_numbers<[1], [1], [0], [0], [0, 0, 1, 0], [], []>} : vector<8x3072xf32>, vector<8x3072xf32>, vector<8x8xf32> -> vector<8x8xf32>
    %c0_10 = arith.constant 0 : index
    %c0_11 = arith.constant 0 : index
    %11 = vector.load %arg5[%c0_10, %c0_11] : memref<8x128xf32, #tpu.memory_space<vmem>>, vector<8x128xf32>
    %cst_12 = arith.constant dense<0.000000e+00> : vector<8x128xf32>
    %12 = tpu.matmul %10, %11, %cst_12 {dimension_numbers = #tpu.dot_dimension_numbers<[1], [0], [0], [1], [0, 0, 1, 1], [], []>} : vector<8x8xf32>, vector<8x128xf32>, vector<8x128xf32> -> vector<8x128xf32>
    %c0_13 = arith.constant 0 : index
    %c0_14 = arith.constant 0 : index
    %13 = vector.load %arg6[%c0_13, %c0_14] : memref<1x128xf32, #tpu.memory_space<vmem>>, vector<1x128xf32>
    %14 = vector.broadcast %13 : vector<1x128xf32> to vector<8x128xf32>
    %15 = arith.addf %12, %14 : vector<8x128xf32>
    %c0_15 = arith.constant 0 : index
    %c0_16 = arith.constant 0 : index
    %16 = vector.load %arg7[%c0_15, %c0_16] : memref<8x128xf32, #tpu.memory_space<vmem>>, vector<8x128xf32>
    tpu.vector_store %arg7[%c0_15, %c0_16], %15 {strides = array<i32>} : memref<8x128xf32, #tpu.memory_space<vmem>>, vector<8x128xf32>,
    return
  }
  func.func @transform_0(%arg0: i32) -> (i32, i32, i32) {
    %c0_i32 = arith.constant 0 : i32
    %c0_i32_0 = arith.constant 0 : i32
    %c0_i32_1 = arith.constant 0 : i32
    return %arg0, %c0_i32, %c0_i32_0 : i32, i32, i32
  }
  func.func @transform_1(%arg0: i32) -> (i32, i32) {
    %c0_i32 = arith.constant 0 : i32
    %c0_i32_0 = arith.constant 0 : i32
    %c0_i32_1 = arith.constant 0 : i32
    return %c0_i32, %c0_i32_0 : i32, i32
  }
  func.func @transform_2(%arg0: i32) -> (i32, i32) {
    %c0_i32 = arith.constant 0 : i32
    %c0_i32_0 = arith.constant 0 : i32
    %c0_i32_1 = arith.constant 0 : i32
    return %c0_i32, %c0_i32_0 : i32, i32
  }
  func.func @transform_3(%arg0: i32) -> (i32, i32) {
    %c0_i32 = arith.constant 0 : i32
    %c0_i32_0 = arith.constant 0 : i32
    %c0_i32_1 = arith.constant 0 : i32
    return %c0_i32, %c0_i32_0 : i32, i32
  }
  func.func @transform_4(%arg0: i32) -> (i32, i32) {
    %c0_i32 = arith.constant 0 : i32
    %c0_i32_0 = arith.constant 0 : i32
    %c0_i32_1 = arith.constant 0 : i32
    return %c0_i32, %c0_i32_0 : i32, i32
  }
  func.func @transform_5(%arg0: i32) -> (i32, i32) {
    %c0_i32 = arith.constant 0 : i32
    %c0_i32_0 = arith.constant 0 : i32
    %c0_i32_1 = arith.constant 0 : i32
    return %c0_i32, %c0_i32_0 : i32, i32
  }
  func.func @transform_6(%arg0: i32) -> (i32, i32) {
    %c0_i32 = arith.constant 0 : i32
    %c0_i32_0 = arith.constant 0 : i32
    return %arg0, %c0_i32 : i32, i32
  }
}

</mosaic_0001>

<llo_original>
// kernel: revnet_forward.1
$region0: #{revnet_forward.1}
  #allocation0 [shape = 'u32[]', space=smem, size = 0x4, offset = 0x4, fixed_abs, tag = 'smem constant byte address 0x4 - core index']
  #allocation1 [shape = 'u32[144,128]{1,0:T(1,128)}', space=vmem, size = 0x12000, scoped, tag = 'internal scratch']
  %s0 = inlined_call_operand.vmem [shape: bf16[2,80,3072], index: 0, kind: input, shape index: {}]
  %s1 = inlined_call_operand.vmem [shape: bf16[8,80], index: 1, kind: input, shape index: {}]
  %s2 = inlined_call_operand.vmem [shape: f32[8,1], index: 2, kind: input, shape index: {}]
  %s3 = inlined_call_operand.vmem [shape: f32[8,3072], index: 3, kind: input, shape index: {}]
  %s4 = inlined_call_operand.vmem [shape: f32[8,128], index: 4, kind: input, shape index: {}]
  %s5 = inlined_call_operand.vmem [shape: f32[1,128], index: 5, kind: input, shape index: {}]
  %s6 = inlined_call_operand.hbm [shape: f32[16,128], index: 6, kind: output, shape index: {}]
  %s7 = sld [smem:[#allocation0]]
  $region57: #{revnet_forward.1} parent=0
    _
  %s9 = ssub.s32 1, %s7
  %s10 = scalar_select 0, %s9, %s7
  $region1: #{revnet_forward.1} parent=0
    #allocation2 [shape = 'u8[8192]{0}', space=vmem, size = 0x2000, scoped, tag = 'output window, operand 0']
    #allocation3 [shape = 's32[2]{0}', space=sflag, size = 0x8, scoped, tag = 'scoped memory for revnet_forward.1']
    %11 = vsyncpa [#allocation3], 0
    %s12 = scalar_lea.sflag [#allocation3], 1
    %13 = vsyncpa %s12, 0
    loop: start=0, step=1, limit=4
    $region2: #{revnet_forward.1} parent=1 // loop_pre_header
      _
    $region3: #{revnet_forward.1} parent=1 // loop_header
      %s15 = sphi 0, %s19
      %p16 = scmp.ge.s32.totalorder %s15, 4
      %s25 = sphi 0, %s27
      %s28 = sphi 0, %s25
      %s29 = sphi 0, %s28
      %s45 = sphi 0, %s29
      %s49 = sphi 0, %s49
      %s51 = sphi 0, %s49
      %s52 = sphi 0, %s51
      %s66 = sphi 0, %s52
      %s70 = sphi 0, %s70
      %s72 = sphi 0, %s70
      %s73 = sphi 0, %s72
      %s87 = sphi 0, %s73
      %s91 = sphi 0, %s91
      %s93 = sphi 0, %s91
      %s94 = sphi 0, %s93
      %s108 = sphi 0, %s94
      %s112 = sphi 0, %s112
      %s114 = sphi 0, %s112
      %s115 = sphi 0, %s114
      %s129 = sphi 0, %s115
      %s133 = sphi 0, %s133
      %s135 = sphi 0, %s133
      %s136 = sphi 0, %s135
      %s150 = sphi 0, %s136
      %s156 = sphi 0, %s158
      %s159 = sphi 0, %s156
      %s160 = sphi 0, %s159
      %s176 = sphi 0, %s160
    $region4: #{revnet_forward.1} parent=1 // loop_header_branch
      %18 = sbr.rel (%p16) target = $region8
    $region5: #{revnet_forward.1} parent=1 // loop_body
      %s20 = ssub.s32 %s15, 1
      %s21 = ssub.s32 %s15, 2
      %s22 = sadd.s32 %s15, 1
      %s23 = ssub.s32 %s15, %s22
      %p24 = scmp.eq.s32.totalorder %s23, 0
      %s26 = sadd.s32 %s25, 1
      %s27 = scalar_select %p24, %s25, %s26
      %p30 = pneg %p24
      %p31 = scmp.eq.s32.totalorder %s15, 1
      %p32 = por %p30, %p31
      %p33 = scmp.ne.s32.totalorder %s25, %s28
      %p34 = scmp.eq.s32.totalorder %s15, 0
      %p35 = por %p33, %p34
      %p36 = scmp.ne.s32.totalorder %s25, %s28
      %p37 = scmp.eq.s32.totalorder %s20, 1
      %p38 = por %p36, %p37
      %p39 = scmp.ne.s32.totalorder %s28, %s29
      %p40 = scmp.eq.s32.totalorder %s20, 0
      %p41 = por %p39, %p40
      %p42 = scmp.ne.s32.totalorder %s28, %s29
      %p43 = scmp.eq.s32.totalorder %s21, 1
      %p44 = por %p42, %p43
      %p46 = scmp.ne.s32.totalorder %s29, %s45
      %p47 = scmp.eq.s32.totalorder %s21, 0
      %p48 = por %p46, %p47
      %s50 = sadd.s32 %s49, 1
      %p53 = scmp.eq.s32.totalorder %s15, 1
      %p54 = scmp.ne.s32.totalorder %s49, %s51
      %p55 = scmp.eq.s32.totalorder %s15, 0
      %p56 = por %p54, %p55
      %p57 = scmp.ne.s32.totalorder %s49, %s51
      %p58 = scmp.eq.s32.totalorder %s20, 1
      %p59 = por %p57, %p58
      %p60 = scmp.ne.s32.totalorder %s51, %s52
      %p61 = scmp.eq.s32.totalorder %s20, 0
      %p62 = por %p60, %p61
      %p63 = scmp.ne.s32.totalorder %s51, %s52
      %p64 = scmp.eq.s32.totalorder %s21, 1
      %p65 = por %p63, %p64
      %p67 = scmp.ne.s32.totalorder %s52, %s66
      %p68 = scmp.eq.s32.totalorder %s21, 0
      %p69 = por %p67, %p68
      %s71 = sadd.s32 %s70, 1
      %p74 = scmp.eq.s32.totalorder %s15, 1
      %p75 = scmp.ne.s32.totalorder %s70, %s72
      %p76 = scmp.eq.s32.totalorder %s15, 0
      %p77 = por %p75, %p76
      %p78 = scmp.ne.s32.totalorder %s70, %s72
      %p79 = scmp.eq.s32.totalorder %s20, 1
      %p80 = por %p78, %p79
      %p81 = scmp.ne.s32.totalorder %s72, %s73
      %p82 = scmp.eq.s32.totalorder %s20, 0
      %p83 = por %p81, %p82
      %p84 = scmp.ne.s32.totalorder %s72, %s73
      %p85 = scmp.eq.s32.totalorder %s21, 1
      %p86 = por %p84, %p85
      %p88 = scmp.ne.s32.totalorder %s73, %s87
      %p89 = scmp.eq.s32.totalorder %s21, 0
      %p90 = por %p88, %p89
      %s92 = sadd.s32 %s91, 1
      %p95 = scmp.eq.s32.totalorder %s15, 1
      %p96 = scmp.ne.s32.totalorder %s91, %s93
      %p97 = scmp.eq.s32.totalorder %s15, 0
      %p98 = por %p96, %p97
      %p99 = scmp.ne.s32.totalorder %s91, %s93
      %p100 = scmp.eq.s32.totalorder %s20, 1
      %p101 = por %p99, %p100
      %p102 = scmp.ne.s32.totalorder %s93, %s94
      %p103 = scmp.eq.s32.totalorder %s20, 0
      %p104 = por %p102, %p103
      %p105 = scmp.ne.s32.totalorder %s93, %s94
      %p106 = scmp.eq.s32.totalorder %s21, 1
      %p107 = por %p105, %p106
      %p109 = scmp.ne.s32.totalorder %s94, %s108
      %p110 = scmp.eq.s32.totalorder %s21, 0
      %p111 = por %p109, %p110
      %s113 = sadd.s32 %s112, 1
      %p116 = scmp.eq.s32.totalorder %s15, 1
      %p117 = scmp.ne.s32.totalorder %s112, %s114
      %p118 = scmp.eq.s32.totalorder %s15, 0
      %p119 = por %p117, %p118
      %p120 = scmp.ne.s32.totalorder %s112, %s114
      %p121 = scmp.eq.s32.totalorder %s20, 1
      %p122 = por %p120, %p121
      %p123 = scmp.ne.s32.totalorder %s114, %s115
      %p124 = scmp.eq.s32.totalorder %s20, 0
      %p125 = por %p123, %p124
      %p126 = scmp.ne.s32.totalorder %s114, %s115
      %p127 = scmp.eq.s32.totalorder %s21, 1
      %p128 = por %p126, %p127
      %p130 = scmp.ne.s32.totalorder %s115, %s129
      %p131 = scmp.eq.s32.totalorder %s21, 0
      %p132 = por %p130, %p131
      %s134 = sadd.s32 %s133, 1
      %p137 = scmp.eq.s32.totalorder %s15, 1
      %p138 = scmp.ne.s32.totalorder %s133, %s135
      %p139 = scmp.eq.s32.totalorder %s15, 0
      %p140 = por %p138, %p139
      %p141 = scmp.ne.s32.totalorder %s133, %s135
      %p142 = scmp.eq.s32.totalorder %s20, 1
      %p143 = por %p141, %p142
      %p144 = scmp.ne.s32.totalorder %s135, %s136
      %p145 = scmp.eq.s32.totalorder %s20, 0
      %p146 = por %p144, %p145
      %p147 = scmp.ne.s32.totalorder %s135, %s136
      %p148 = scmp.eq.s32.totalorder %s21, 1
      %p149 = por %p147, %p148
      %p151 = scmp.ne.s32.totalorder %s136, %s150
      %p152 = scmp.eq.s32.totalorder %s21, 0
      %p153 = por %p151, %p152
      %s154 = ssub.s32 %s15, %s22
      %p155 = scmp.eq.s32.totalorder %s154, 0
      %s157 = sadd.s32 %s156, 1
      %s158 = scalar_select %p155, %s156, %s157
      %p161 = pneg %p155
      %p162 = scmp.eq.s32.totalorder %s15, 1
      %p163 = por %p161, %p162
      %p164 = scmp.ne.s32.totalorder %s156, %s159
      %p165 = scmp.eq.s32.totalorder %s15, 0
      %p166 = por %p164, %p165
      %p167 = scmp.ne.s32.totalorder %s156, %s159
      %p168 = scmp.eq.s32.totalorder %s20, 1
      %p169 = por %p167, %p168
      %p170 = scmp.ne.s32.totalorder %s159, %s160
      %p171 = scmp.eq.s32.totalorder %s20, 0
      %p172 = por %p170, %p171
      %p173 = scmp.ne.s32.totalorder %s159, %s160
      %p174 = scmp.eq.s32.totalorder %s21, 1
      %p175 = por %p173, %p174
      %p177 = scmp.ne.s32.totalorder %s160, %s176
      %p178 = scmp.eq.s32.totalorder %s21, 0
      %p179 = por %p177, %p178
      %p180 = scmp.le.s32.totalorder 1, %s15
      %p181 = scmp.lt.s32.totalorder %s15, 3
      %p182 = pnand %p180, %p181
      %p183 = pneg %p182
      // Predicated region
      $region9: #{revnet_forward.1} parent=5 // pred_check
        _
      $region10: #{revnet_forward.1} parent=5 // pred_check_branch
        %185 = sbr.rel (%p182) target = $region12
      $region11: #{revnet_forward.1} parent=5 // pred_region
        %s186 = ssub.s32 %s15, 1
        // Predicated region
        $region13: #{revnet_forward.1} parent=11 // pred_check
          %p187 = pneg %p62
        $region14: #{revnet_forward.1} parent=11 // pred_check_branch
          %189 = sbr.rel (%p187) target = $region16
        $region15: #{revnet_forward.1} parent=11 // pred_region
          _
        $region16: #{revnet_forward.1} parent=11 // pred_fallthru
          _
        // Predicated region
        $region17: #{revnet_forward.1} parent=11 // pred_check
          %p190 = pneg %p83
        $region18: #{revnet_forward.1} parent=11 // pred_check_branch
          %192 = sbr.rel (%p190) target = $region20
        $region19: #{revnet_forward.1} parent=11 // pred_region
          _
        $region20: #{revnet_forward.1} parent=11 // pred_fallthru
          _
        // Predicated region
        $region21: #{revnet_forward.1} parent=11 // pred_check
          %p193 = pneg %p104
        $region22: #{revnet_forward.1} parent=11 // pred_check_branch
          %195 = sbr.rel (%p193) target = $region24
        $region23: #{revnet_forward.1} parent=11 // pred_region
          _
        $region24: #{revnet_forward.1} parent=11 // pred_fallthru
          _
        // Predicated region
        $region25: #{revnet_forward.1} parent=11 // pred_check
          %p196 = pneg %p125
        $region26: #{revnet_forward.1} parent=11 // pred_check_branch
          %198 = sbr.rel (%p196) target = $region28
        $region27: #{revnet_forward.1} parent=11 // pred_region
          _
        $region28: #{revnet_forward.1} parent=11 // pred_fallthru
          _
        // Predicated region
        $region29: #{revnet_forward.1} parent=11 // pred_check
          %p199 = pneg %p146
        $region30: #{revnet_forward.1} parent=11 // pred_check_branch
          %201 = sbr.rel (%p199) target = $region32
        $region31: #{revnet_forward.1} parent=11 // pred_region
          _
        $region32: #{revnet_forward.1} parent=11 // pred_fallthru
          _
      $region12: #{revnet_forward.1} parent=5 // pred_fallthru
        _
      %p202 = scmp.lt.s32.totalorder %s15, 2
      // Predicated region
      $region33: #{revnet_forward.1} parent=5 // pred_check
        %p203 = pneg %p202
      $region34: #{revnet_forward.1} parent=5 // pred_check_branch
        %205 = sbr.rel (%p203) target = $region36
      $region35: #{revnet_forward.1} parent=5 // pred_region
        // Predicated region
        $region37: #{revnet_forward.1} parent=35 // pred_check
          %p206 = pneg %p35
        $region38: #{revnet_forward.1} parent=35 // pred_check_branch
          %208 = sbr.rel (%p206) target = $region40
        $region39: #{revnet_forward.1} parent=35 // pred_region
          %p209 = scmp.lt.s32.totalorder %s15, 1
          %s210 = scalar_select %p209, %s15, 1
          %s211 = smul.addr %s210, 240
          %s212 = smul.addr %s211, 4
          %s213 = scalar_lea.vmem %s0, %s212
        $region40: #{revnet_forward.1} parent=35 // pred_fallthru
          _
      $region36: #{revnet_forward.1} parent=5 // pred_fallthru
        _
      %p214 = scmp.le.s32.totalorder 1, %s15
      %p215 = scmp.lt.s32.totalorder %s15, 3
      %p216 = pnand %p214, %p215
      %p217 = pneg %p216
      // Predicated region
      $region41: #{revnet_forward.1} parent=5 // pred_check
        _
      $region42: #{revnet_forward.1} parent=5 // pred_check_branch
        %219 = sbr.rel (%p216) target = $region44
      $region43: #{revnet_forward.1} parent=5 // pred_region
        %s220 = ssub.s32 %s15, 1
        %p221 = scmp.lt.s32.totalorder %s20, 1
        %s222 = scalar_select %p221, %s20, 1
        %s223 = smul.addr %s222, 240
        %s224 = smul.addr %s223, 4
        %s225 = scalar_lea.vmem %s0, %s224
        %p226 = pneg %p41
        %p227 = pneg %p38
        %p228 = pneg %p62
        %p229 = pneg %p59
        %p230 = pneg %p83
        %p231 = pneg %p80
        %p232 = pneg %p104
        %p233 = pneg %p101
        %p234 = pneg %p125
        %p235 = pneg %p122
        %p236 = pneg %p146
        %p237 = pneg %p143
        %p238 = pneg %p172
        %p239 = pneg %p169
        %s240 = sand.u32 %s159, 1
        %s241 = scalar_lea.sflag [#allocation3], %s240
        %s242 = sand.u32 %s159, 1
        %s243 = smul.addr %s242, 8
        %s244 = scalar_lea.vmem [#allocation2], %s243
        %p245 = scmp.lt.s32.totalorder %s20, 1
        %s246 = scalar_select %p245, %s20, 1
        %s247 = smul.addr %s246, 240
        %s248 = smul.addr %s247, 4
        %s249 = scalar_lea.vmem %s0, %s248
        %v251 = vld [vmem:[%s1] sm:$0xf]
        %v252 = vld [vmem:[%s249] sm:$0xff]
        %v253 = vld [vmem:[%s249 + $0x8] sm:$0xff]
        %v254 = vld [vmem:[%s249 + $0x10] sm:$0xff]
        %v255 = vld [vmem:[%s249 + $0x18] sm:$0xff]
        %v256 = vld [vmem:[%s249 + $0x20] sm:$0xff]
        %v257 = vld [vmem:[%s249 + $0x28] sm:$0xff]
        %v258 = vld [vmem:[%s249 + $0x30] sm:$0xff]
        %v259 = vld [vmem:[%s249 + $0x38] sm:$0xff]
        %v260 = vld [vmem:[%s249 + $0x40] sm:$0xff]
        %v261 = vld [vmem:[%s249 + $0x48] sm:$0xff]
        %v262 = vld [vmem:[%s249 + $0x50] sm:$0xff]
        %v263 = vld [vmem:[%s249 + $0x58] sm:$0xff]
        %v264 = vld [vmem:[%s249 + $0x60] sm:$0xff]
        %v265 = vld [vmem:[%s249 + $0x68] sm:$0xff]
        %v266 = vld [vmem:[%s249 + $0x70] sm:$0xff]
        %v267 = vld [vmem:[%s249 + $0x78] sm:$0xff]
        %v268 = vld [vmem:[%s249 + $0x80] sm:$0xff]
        %v269 = vld [vmem:[%s249 + $0x88] sm:$0xff]
        %v270 = vld [vmem:[%s249 + $0x90] sm:$0xff]
        %v271 = vld [vmem:[%s249 + $0x98] sm:$0xff]
        %v272 = vld [vmem:[%s249 + $0xa0] sm:$0xff]
        %v273 = vld [vmem:[%s249 + $0xa8] sm:$0xff]
        %v274 = vld [vmem:[%s249 + $0xb0] sm:$0xff]
        %v275 = vld [vmem:[%s249 + $0xb8] sm:$0xff]
        %v276 = vld [vmem:[%s249 + $0xc0] sm:$0xff]
        %v277 = vld [vmem:[%s249 + $0xc8] sm:$0xff]
        %v278 = vld [vmem:[%s249 + $0xd0] sm:$0xff]
        %v279 = vld [vmem:[%s249 + $0xd8] sm:$0xff]
        %v280 = vld [vmem:[%s249 + $0xe0] sm:$0xff]
        %v281 = vld [vmem:[%s249 + $0xe8] sm:$0xff]
        %v282 = vld [vmem:[%s249 + $0xf0] sm:$0xff]
        %v283 = vld [vmem:[%s249 + $0xf8] sm:$0xff]
        %v284 = vld [vmem:[%s249 + $0x100] sm:$0xff]
        %v285 = vld [vmem:[%s249 + $0x108] sm:$0xff]
        %v286 = vld [vmem:[%s249 + $0x110] sm:$0xff]
        %v287 = vld [vmem:[%s249 + $0x118] sm:$0xff]
        %v288 = vld [vmem:[%s249 + $0x120] sm:$0xff]
        %v289 = vld [vmem:[%s249 + $0x128] sm:$0xff]
        %v290 = vld [vmem:[%s249 + $0x130] sm:$0xff]
        %v291 = vld [vmem:[%s249 + $0x138] sm:$0xff]
        %v292 = vld [vmem:[%s249 + $0x140] sm:$0xff]
        %v293 = vld [vmem:[%s249 + $0x148] sm:$0xff]
        %v294 = vld [vmem:[%s249 + $0x150] sm:$0xff]
        %v295 = vld [vmem:[%s249 + $0x158] sm:$0xff]
        %v296 = vld [vmem:[%s249 + $0x160] sm:$0xff]
        %v297 = vld [vmem:[%s249 + $0x168] sm:$0xff]
        %v298 = vld [vmem:[%s249 + $0x170] sm:$0xff]
        %v299 = vld [vmem:[%s249 + $0x178] sm:$0xff]
        %v300 = vld [vmem:[%s249 + $0x180] sm:$0xff]
        %v301 = vld [vmem:[%s249 + $0x188] sm:$0xff]
        %v302 = vld [vmem:[%s249 + $0x190] sm:$0xff]
        %v303 = vld [vmem:[%s249 + $0x198] sm:$0xff]
        %v304 = vld [vmem:[%s249 + $0x1a0] sm:$0xff]
        %v305 = vld [vmem:[%s249 + $0x1a8] sm:$0xff]
        %v306 = vld [vmem:[%s249 + $0x1b0] sm:$0xff]
        %v307 = vld [vmem:[%s249 + $0x1b8] sm:$0xff]
        %v308 = vld [vmem:[%s249 + $0x1c0] sm:$0xff]
        %v309 = vld [vmem:[%s249 + $0x1c8] sm:$0xff]
        %v310 = vld [vmem:[%s249 + $0x1d0] sm:$0xff]
        %v311 = vld [vmem:[%s249 + $0x1d8] sm:$0xff]
        %v312 = vld [vmem:[%s249 + $0x1e0] sm:$0xff]
        %v313 = vld [vmem:[%s249 + $0x1e8] sm:$0xff]
        %v314 = vld [vmem:[%s249 + $0x1f0] sm:$0xff]
        %v315 = vld [vmem:[%s249 + $0x1f8] sm:$0xff]
        %v316 = vld [vmem:[%s249 + $0x200] sm:$0xff]
        %v317 = vld [vmem:[%s249 + $0x208] sm:$0xff]
        %v318 = vld [vmem:[%s249 + $0x210] sm:$0xff]
        %v319 = vld [vmem:[%s249 + $0x218] sm:$0xff]
        %v320 = vld [vmem:[%s249 + $0x220] sm:$0xff]
        %v321 = vld [vmem:[%s249 + $0x228] sm:$0xff]
        %v322 = vld [vmem:[%s249 + $0x230] sm:$0xff]
        %v323 = vld [vmem:[%s249 + $0x238] sm:$0xff]
        %v324 = vld [vmem:[%s249 + $0x240] sm:$0xff]
        %v325 = vld [vmem:[%s249 + $0x248] sm:$0xff]
        %v326 = vld [vmem:[%s249 + $0x250] sm:$0xff]
        %v327 = vld [vmem:[%s249 + $0x258] sm:$0xff]
        %v328 = vld [vmem:[%s249 + $0x260] sm:$0xff]
        %v329 = vld [vmem:[%s249 + $0x268] sm:$0xff]
        %v330 = vld [vmem:[%s249 + $0x270] sm:$0xff]
        %v331 = vld [vmem:[%s249 + $0x278] sm:$0xff]
        %v332 = vld [vmem:[%s249 + $0x280] sm:$0xff]
        %v333 = vld [vmem:[%s249 + $0x288] sm:$0xff]
        %v334 = vld [vmem:[%s249 + $0x290] sm:$0xff]
        %v335 = vld [vmem:[%s249 + $0x298] sm:$0xff]
        %v336 = vld [vmem:[%s249 + $0x2a0] sm:$0xff]
        %v337 = vld [vmem:[%s249 + $0x2a8] sm:$0xff]
        %v338 = vld [vmem:[%s249 + $0x2b0] sm:$0xff]
        %v339 = vld [vmem:[%s249 + $0x2b8] sm:$0xff]
        %v340 = vld [vmem:[%s249 + $0x2c0] sm:$0xff]
        %v341 = vld [vmem:[%s249 + $0x2c8] sm:$0xff]
        %v342 = vld [vmem:[%s249 + $0x2d0] sm:$0xff]
        %v343 = vld [vmem:[%s249 + $0x2d8] sm:$0xff]
        %v344 = vld [vmem:[%s249 + $0x2e0] sm:$0xff]
        %v345 = vld [vmem:[%s249 + $0x2e8] sm:$0xff]
        %v346 = vld [vmem:[%s249 + $0x2f0] sm:$0xff]
        %v347 = vld [vmem:[%s249 + $0x2f8] sm:$0xff]
        %v348 = vld [vmem:[%s249 + $0x300] sm:$0xff]
        %v349 = vld [vmem:[%s249 + $0x308] sm:$0xff]
        %v350 = vld [vmem:[%s249 + $0x310] sm:$0xff]
        %v351 = vld [vmem:[%s249 + $0x318] sm:$0xff]
        %v352 = vld [vmem:[%s249 + $0x320] sm:$0xff]
        %v353 = vld [vmem:[%s249 + $0x328] sm:$0xff]
        %v354 = vld [vmem:[%s249 + $0x330] sm:$0xff]
        %v355 = vld [vmem:[%s249 + $0x338] sm:$0xff]
        %v356 = vld [vmem:[%s249 + $0x340] sm:$0xff]
        %v357 = vld [vmem:[%s249 + $0x348] sm:$0xff]
        %v358 = vld [vmem:[%s249 + $0x350] sm:$0xff]
        %v359 = vld [vmem:[%s249 + $0x358] sm:$0xff]
        %v360 = vld [vmem:[%s249 + $0x360] sm:$0xff]
        %v361 = vld [vmem:[%s249 + $0x368] sm:$0xff]
        %v362 = vld [vmem:[%s249 + $0x370] sm:$0xff]
        %v363 = vld [vmem:[%s249 + $0x378] sm:$0xff]
        %v364 = vld [vmem:[%s249 + $0x380] sm:$0xff]
        %v365 = vld [vmem:[%s249 + $0x388] sm:$0xff]
        %v366 = vld [vmem:[%s249 + $0x390] sm:$0xff]
        %v367 = vld [vmem:[%s249 + $0x398] sm:$0xff]
        %v368 = vld [vmem:[%s249 + $0x3a0] sm:$0xff]
        %v369 = vld [vmem:[%s249 + $0x3a8] sm:$0xff]
        %v370 = vld [vmem:[%s249 + $0x3b0] sm:$0xff]
        %v371 = vld [vmem:[%s249 + $0x3b8] sm:$0xff]
        %v372 = vld [vmem:[%s2] sm:$0xff]
        %374 = vset.pattern.permute.xlu0 0
        %375 = vperm.xlu0 %374, %v372
        %v376 = vpop.permute.xlu0 %375
        %v498 = vunpack.c.l.b16 %v252
        %v499 = vunpack.c.h.b16 %v252
        %v500 = vunpack.c.l.b16 %v253
        %v501 = vunpack.c.h.b16 %v253
        %v502 = vunpack.c.l.b16 %v254
        %v503 = vunpack.c.h.b16 %v254
        %v504 = vunpack.c.l.b16 %v255
        %v505 = vunpack.c.h.b16 %v255
        %v506 = vunpack.c.l.b16 %v256
        %v507 = vunpack.c.h.b16 %v256
        %v508 = vunpack.c.l.b16 %v257
        %v509 = vunpack.c.h.b16 %v257
        %v510 = vunpack.c.l.b16 %v258
        %v511 = vunpack.c.h.b16 %v258
        %v512 = vunpack.c.l.b16 %v259
        %v513 = vunpack.c.h.b16 %v259
        %v514 = vunpack.c.l.b16 %v260
        %v515 = vunpack.c.h.b16 %v260
        %v516 = vunpack.c.l.b16 %v261
        %v517 = vunpack.c.h.b16 %v261
        %v518 = vunpack.c.l.b16 %v262
        %v519 = vunpack.c.h.b16 %v262
        %v520 = vunpack.c.l.b16 %v263
        %v521 = vunpack.c.h.b16 %v263
        %v522 = vunpack.c.l.b16 %v264
        %v523 = vunpack.c.h.b16 %v264
        %v524 = vunpack.c.l.b16 %v265
        %v525 = vunpack.c.h.b16 %v265
        %v526 = vunpack.c.l.b16 %v266
        %v527 = vunpack.c.h.b16 %v266
        %v528 = vunpack.c.l.b16 %v267
        %v529 = vunpack.c.h.b16 %v267
        %v530 = vunpack.c.l.b16 %v268
        %v531 = vunpack.c.h.b16 %v268
        %v532 = vunpack.c.l.b16 %v269
        %v533 = vunpack.c.h.b16 %v269
        %v534 = vunpack.c.l.b16 %v270
        %v535 = vunpack.c.h.b16 %v270
        %v536 = vunpack.c.l.b16 %v271
        %v537 = vunpack.c.h.b16 %v271
        %v538 = vunpack.c.l.b16 %v272
        %v539 = vunpack.c.h.b16 %v272
        %v540 = vunpack.c.l.b16 %v273
        %v541 = vunpack.c.h.b16 %v273
        %v542 = vunpack.c.l.b16 %v274
        %v543 = vunpack.c.h.b16 %v274
        %v544 = vunpack.c.l.b16 %v275
        %v545 = vunpack.c.h.b16 %v275
        %v546 = vunpack.c.l.b16 %v276
        %v547 = vunpack.c.h.b16 %v276
        %v548 = vunpack.c.l.b16 %v277
        %v549 = vunpack.c.h.b16 %v277
        %v550 = vunpack.c.l.b16 %v278
        %v551 = vunpack.c.h.b16 %v278
        %v552 = vunpack.c.l.b16 %v279
        %v553 = vunpack.c.h.b16 %v279
        %v554 = vunpack.c.l.b16 %v280
        %v555 = vunpack.c.h.b16 %v280
        %v556 = vunpack.c.l.b16 %v281
        %v557 = vunpack.c.h.b16 %v281
        %v558 = vunpack.c.l.b16 %v282
        %v559 = vunpack.c.h.b16 %v282
        %v560 = vunpack.c.l.b16 %v283
        %v561 = vunpack.c.h.b16 %v283
        %v562 = vunpack.c.l.b16 %v284
        %v563 = vunpack.c.h.b16 %v284
        %v564 = vunpack.c.l.b16 %v285
        %v565 = vunpack.c.h.b16 %v285
        %v566 = vunpack.c.l.b16 %v286
        %v567 = vunpack.c.h.b16 %v286
        %v568 = vunpack.c.l.b16 %v287
        %v569 = vunpack.c.h.b16 %v287
        %v570 = vunpack.c.l.b16 %v288
        %v571 = vunpack.c.h.b16 %v288
        %v572 = vunpack.c.l.b16 %v289
        %v573 = vunpack.c.h.b16 %v289
        %v574 = vunpack.c.l.b16 %v290
        %v575 = vunpack.c.h.b16 %v290
        %v576 = vunpack.c.l.b16 %v291
        %v577 = vunpack.c.h.b16 %v291
        %v578 = vunpack.c.l.b16 %v292
        %v579 = vunpack.c.h.b16 %v292
        %v580 = vunpack.c.l.b16 %v293
        %v581 = vunpack.c.h.b16 %v293
        %v582 = vunpack.c.l.b16 %v294
        %v583 = vunpack.c.h.b16 %v294
        %v584 = vunpack.c.l.b16 %v295
        %v585 = vunpack.c.h.b16 %v295
        %v586 = vunpack.c.l.b16 %v296
        %v587 = vunpack.c.h.b16 %v296
        %v588 = vunpack.c.l.b16 %v297
        %v589 = vunpack.c.h.b16 %v297
        %v590 = vunpack.c.l.b16 %v298
        %v591 = vunpack.c.h.b16 %v298
        %v592 = vunpack.c.l.b16 %v299
        %v593 = vunpack.c.h.b16 %v299
        %v594 = vunpack.c.l.b16 %v300
        %v595 = vunpack.c.h.b16 %v300
        %v596 = vunpack.c.l.b16 %v301
        %v597 = vunpack.c.h.b16 %v301
        %v598 = vunpack.c.l.b16 %v302
        %v599 = vunpack.c.h.b16 %v302
        %v600 = vunpack.c.l.b16 %v303
        %v601 = vunpack.c.h.b16 %v303
        %v602 = vunpack.c.l.b16 %v304
        %v603 = vunpack.c.h.b16 %v304
        %v604 = vunpack.c.l.b16 %v305
        %v605 = vunpack.c.h.b16 %v305
        %v606 = vunpack.c.l.b16 %v306
        %v607 = vunpack.c.h.b16 %v306
        %v608 = vunpack.c.l.b16 %v307
        %v609 = vunpack.c.h.b16 %v307
        %v610 = vunpack.c.l.b16 %v308
        %v611 = vunpack.c.h.b16 %v308
        %v612 = vunpack.c.l.b16 %v309
        %v613 = vunpack.c.h.b16 %v309
        %v614 = vunpack.c.l.b16 %v310
        %v615 = vunpack.c.h.b16 %v310
        %v616 = vunpack.c.l.b16 %v311
        %v617 = vunpack.c.h.b16 %v311
        %v618 = vunpack.c.l.b16 %v312
        %v619 = vunpack.c.h.b16 %v312
        %v620 = vunpack.c.l.b16 %v313
        %v621 = vunpack.c.h.b16 %v313
        %v622 = vunpack.c.l.b16 %v314
        %v623 = vunpack.c.h.b16 %v314
        %v624 = vunpack.c.l.b16 %v315
        %v625 = vunpack.c.h.b16 %v315
        %v626 = vunpack.c.l.b16 %v316
        %v627 = vunpack.c.h.b16 %v316
        %v628 = vunpack.c.l.b16 %v317
        %v629 = vunpack.c.h.b16 %v317
        %v630 = vunpack.c.l.b16 %v318
        %v631 = vunpack.c.h.b16 %v318
        %v632 = vunpack.c.l.b16 %v319
        %v633 = vunpack.c.h.b16 %v319
        %v634 = vunpack.c.l.b16 %v320
        %v635 = vunpack.c.h.b16 %v320
        %v636 = vunpack.c.l.b16 %v321
        %v637 = vunpack.c.h.b16 %v321
        %v638 = vunpack.c.l.b16 %v322
        %v639 = vunpack.c.h.b16 %v322
        %v640 = vunpack.c.l.b16 %v323
        %v641 = vunpack.c.h.b16 %v323
        %v642 = vunpack.c.l.b16 %v324
        %v643 = vunpack.c.h.b16 %v324
        %v644 = vunpack.c.l.b16 %v325
        %v645 = vunpack.c.h.b16 %v325
        %v646 = vunpack.c.l.b16 %v326
        %v647 = vunpack.c.h.b16 %v326
        %v648 = vunpack.c.l.b16 %v327
        %v649 = vunpack.c.h.b16 %v327
        %v650 = vunpack.c.l.b16 %v328
        %v651 = vunpack.c.h.b16 %v328
        %v652 = vunpack.c.l.b16 %v329
        %v653 = vunpack.c.h.b16 %v329
        %v654 = vunpack.c.l.b16 %v330
        %v655 = vunpack.c.h.b16 %v330
        %v656 = vunpack.c.l.b16 %v331
        %v657 = vunpack.c.h.b16 %v331
        %v658 = vunpack.c.l.b16 %v332
        %v659 = vunpack.c.h.b16 %v332
        %v660 = vunpack.c.l.b16 %v333
        %v661 = vunpack.c.h.b16 %v333
        %v662 = vunpack.c.l.b16 %v334
        %v663 = vunpack.c.h.b16 %v334
        %v664 = vunpack.c.l.b16 %v335
        %v665 = vunpack.c.h.b16 %v335
        %v666 = vunpack.c.l.b16 %v336
        %v667 = vunpack.c.h.b16 %v336
        %v668 = vunpack.c.l.b16 %v337
        %v669 = vunpack.c.h.b16 %v337
        %v670 = vunpack.c.l.b16 %v338
        %v671 = vunpack.c.h.b16 %v338
        %v672 = vunpack.c.l.b16 %v339
        %v673 = vunpack.c.h.b16 %v339
        %v674 = vunpack.c.l.b16 %v340
        %v675 = vunpack.c.h.b16 %v340
        %v676 = vunpack.c.l.b16 %v341
        %v677 = vunpack.c.h.b16 %v341
        %v678 = vunpack.c.l.b16 %v342
        %v679 = vunpack.c.h.b16 %v342
        %v680 = vunpack.c.l.b16 %v343
        %v681 = vunpack.c.h.b16 %v343
        %v682 = vunpack.c.l.b16 %v344
        %v683 = vunpack.c.h.b16 %v344
        %v684 = vunpack.c.l.b16 %v345
        %v685 = vunpack.c.h.b16 %v345
        %v686 = vunpack.c.l.b16 %v346
        %v687 = vunpack.c.h.b16 %v346
        %v688 = vunpack.c.l.b16 %v347
        %v689 = vunpack.c.h.b16 %v347
        %v690 = vunpack.c.l.b16 %v348
        %v691 = vunpack.c.h.b16 %v348
        %v692 = vunpack.c.l.b16 %v349
        %v693 = vunpack.c.h.b16 %v349
        %v694 = vunpack.c.l.b16 %v350
        %v695 = vunpack.c.h.b16 %v350
        %v696 = vunpack.c.l.b16 %v351
        %v697 = vunpack.c.h.b16 %v351
        %v698 = vunpack.c.l.b16 %v352
        %v699 = vunpack.c.h.b16 %v352
        %v700 = vunpack.c.l.b16 %v353
        %v701 = vunpack.c.h.b16 %v353
        %v702 = vunpack.c.l.b16 %v354
        %v703 = vunpack.c.h.b16 %v354
        %v704 = vunpack.c.l.b16 %v355
        %v705 = vunpack.c.h.b16 %v355
        %v706 = vunpack.c.l.b16 %v356
        %v707 = vunpack.c.h.b16 %v356
        %v708 = vunpack.c.l.b16 %v357
        %v709 = vunpack.c.h.b16 %v357
        %v710 = vunpack.c.l.b16 %v358
        %v711 = vunpack.c.h.b16 %v358
        %v712 = vunpack.c.l.b16 %v359
        %v713 = vunpack.c.h.b16 %v359
        %v714 = vunpack.c.l.b16 %v360
        %v715 = vunpack.c.h.b16 %v360
        %v716 = vunpack.c.l.b16 %v361
        %v717 = vunpack.c.h.b16 %v361
        %v718 = vunpack.c.l.b16 %v362
        %v719 = vunpack.c.h.b16 %v362
        %v720 = vunpack.c.l.b16 %v363
        %v721 = vunpack.c.h.b16 %v363
        %v722 = vunpack.c.l.b16 %v364
        %v723 = vunpack.c.h.b16 %v364
        %v724 = vunpack.c.l.b16 %v365
        %v725 = vunpack.c.h.b16 %v365
        %v726 = vunpack.c.l.b16 %v366
        %v727 = vunpack.c.h.b16 %v366
        %v728 = vunpack.c.l.b16 %v367
        %v729 = vunpack.c.h.b16 %v367
        %v730 = vunpack.c.l.b16 %v368
        %v731 = vunpack.c.h.b16 %v368
        %v732 = vunpack.c.l.b16 %v369
        %v733 = vunpack.c.h.b16 %v369
        %v734 = vunpack.c.l.b16 %v370
        %v735 = vunpack.c.h.b16 %v370
        %v736 = vunpack.c.l.b16 %v371
        %v737 = vunpack.c.h.b16 %v371
        %v738 = vpack.c.b16 %v522, %v498
        %v739 = vpack.c.b16 %v523, %v499
        %v740 = vpack.c.b16 %v524, %v500
        %v741 = vpack.c.b16 %v525, %v501
        %v742 = vpack.c.b16 %v526, %v502
        %v743 = vpack.c.b16 %v527, %v503
        %v744 = vpack.c.b16 %v528, %v504
        %v745 = vpack.c.b16 %v529, %v505
        %v746 = vpack.c.b16 %v530, %v506
        %v747 = vpack.c.b16 %v531, %v507
        %v748 = vpack.c.b16 %v532, %v508
        %v749 = vpack.c.b16 %v533, %v509
        %v750 = vpack.c.b16 %v534, %v510
        %v751 = vpack.c.b16 %v535, %v511
        %v752 = vpack.c.b16 %v536, %v512
        %v753 = vpack.c.b16 %v537, %v513
        %v754 = vpack.c.b16 %v538, %v514
        %v755 = vpack.c.b16 %v539, %v515
        %v756 = vpack.c.b16 %v540, %v516
        %v757 = vpack.c.b16 %v541, %v517
        %v758 = vpack.c.b16 %v542, %v518
        %v759 = vpack.c.b16 %v543, %v519
        %v760 = vpack.c.b16 %v544, %v520
        %v761 = vpack.c.b16 %v545, %v521
        %v762 = vpack.c.b16 %v570, %v546
        %v763 = vpack.c.b16 %v571, %v547
        %v764 = vpack.c.b16 %v572, %v548
        %v765 = vpack.c.b16 %v573, %v549
        %v766 = vpack.c.b16 %v574, %v550
        %v767 = vpack.c.b16 %v575, %v551
        %v768 = vpack.c.b16 %v576, %v552
        %v769 = vpack.c.b16 %v577, %v553
        %v770 = vpack.c.b16 %v578, %v554
        %v771 = vpack.c.b16 %v579, %v555
        %v772 = vpack.c.b16 %v580, %v556
        %v773 = vpack.c.b16 %v581, %v557
        %v774 = vpack.c.b16 %v582, %v558
        %v775 = vpack.c.b16 %v583, %v559
        %v776 = vpack.c.b16 %v584, %v560
        %v777 = vpack.c.b16 %v585, %v561
        %v778 = vpack.c.b16 %v586, %v562
        %v779 = vpack.c.b16 %v587, %v563
        %v780 = vpack.c.b16 %v588, %v564
        %v781 = vpack.c.b16 %v589, %v565
        %v782 = vpack.c.b16 %v590, %v566
        %v783 = vpack.c.b16 %v591, %v567
        %v784 = vpack.c.b16 %v592, %v568
        %v785 = vpack.c.b16 %v593, %v569
        %v786 = vpack.c.b16 %v618, %v594
        %v787 = vpack.c.b16 %v619, %v595
        %v788 = vpack.c.b16 %v620, %v596
        %v789 = vpack.c.b16 %v621, %v597
        %v790 = vpack.c.b16 %v622, %v598
        %v791 = vpack.c.b16 %v623, %v599
        %v792 = vpack.c.b16 %v624, %v600
        %v793 = vpack.c.b16 %v625, %v601
        %v794 = vpack.c.b16 %v626, %v602
        %v795 = vpack.c.b16 %v627, %v603
        %v796 = vpack.c.b16 %v628, %v604
        %v797 = vpack.c.b16 %v629, %v605
        %v798 = vpack.c.b16 %v630, %v606
        %v799 = vpack.c.b16 %v631, %v607
        %v800 = vpack.c.b16 %v632, %v608
        %v801 = vpack.c.b16 %v633, %v609
        %v802 = vpack.c.b16 %v634, %v610
        %v803 = vpack.c.b16 %v635, %v611
        %v804 = vpack.c.b16 %v636, %v612
        %v805 = vpack.c.b16 %v637, %v613
        %v806 = vpack.c.b16 %v638, %v614
        %v807 = vpack.c.b16 %v639, %v615
        %v808 = vpack.c.b16 %v640, %v616
        %v809 = vpack.c.b16 %v641, %v617
        %v810 = vpack.c.b16 %v666, %v642
        %v811 = vpack.c.b16 %v667, %v643
        %v812 = vpack.c.b16 %v668, %v644
        %v813 = vpack.c.b16 %v669, %v645
        %v814 = vpack.c.b16 %v670, %v646
        %v815 = vpack.c.b16 %v671, %v647
        %v816 = vpack.c.b16 %v672, %v648
        %v817 = vpack.c.b16 %v673, %v649
        %v818 = vpack.c.b16 %v674, %v650
        %v819 = vpack.c.b16 %v675, %v651
        %v820 = vpack.c.b16 %v676, %v652
        %v821 = vpack.c.b16 %v677, %v653
        %v822 = vpack.c.b16 %v678, %v654
        %v823 = vpack.c.b16 %v679, %v655
        %v824 = vpack.c.b16 %v680, %v656
        %v825 = vpack.c.b16 %v681, %v657
        %v826 = vpack.c.b16 %v682, %v658
        %v827 = vpack.c.b16 %v683, %v659
        %v828 = vpack.c.b16 %v684, %v660
        %v829 = vpack.c.b16 %v685, %v661
        %v830 = vpack.c.b16 %v686, %v662
        %v831 = vpack.c.b16 %v687, %v663
        %v832 = vpack.c.b16 %v688, %v664
        %v833 = vpack.c.b16 %v689, %v665
        %v834 = vpack.c.b16 %v714, %v690
        %v835 = vpack.c.b16 %v715, %v691
        %v836 = vpack.c.b16 %v716, %v692
        %v837 = vpack.c.b16 %v717, %v693
        %v838 = vpack.c.b16 %v718, %v694
        %v839 = vpack.c.b16 %v719, %v695
        %v840 = vpack.c.b16 %v720, %v696
        %v841 = vpack.c.b16 %v721, %v697
        %v842 = vpack.c.b16 %v722, %v698
        %v843 = vpack.c.b16 %v723, %v699
        %v844 = vpack.c.b16 %v724, %v700
        %v845 = vpack.c.b16 %v725, %v701
        %v846 = vpack.c.b16 %v726, %v702
        %v847 = vpack.c.b16 %v727, %v703
        %v848 = vpack.c.b16 %v728, %v704
        %v849 = vpack.c.b16 %v729, %v705
        %v850 = vpack.c.b16 %v730, %v706
        %v851 = vpack.c.b16 %v731, %v707
        %v852 = vpack.c.b16 %v732, %v708
        %v853 = vpack.c.b16 %v733, %v709
        %v854 = vpack.c.b16 %v734, %v710
        %v855 = vpack.c.b16 %v735, %v711
        %v856 = vpack.c.b16 %v736, %v712
        %v857 = vpack.c.b16 %v737, %v713
        %vm978 = vcmask 654336
        %v980 = vsel %vm978, %v251, 0
        %982 = vmatprep.subr.bf16.mxu0 %v739
        %983 = vmatpush1.bf16.msra.mxu0 %v738
        %984 = vmatprep.subr.bf16.mxu0 %v763
        %985 = vmatpush1.bf16.msra.mxu0 %v762
        %986 = vmatprep.subr.bf16.mxu0 %v787
        %987 = vmatpush1.bf16.msra.mxu0 %v786
        %988 = vmatprep.subr.bf16.mxu0 %v811
        %989 = vmatpush1.bf16.msra.mxu0 %v810
        %990 = vmatprep.subr.bf16.mxu0 %v835
        %991 = vmatpush1.bf16.msra.mxu0 %v834
        %992 = vmatprep.subr.bf16.mxu0 0
        %993 = vmatpush1.bf16.msra.mxu0 0
        %994 = vmatprep.subr.bf16.mxu0 0
        %995 = vmatpush1.bf16.msra.mxu0 0
        %996 = vmatprep.subr.bf16.mxu0 0
        %997 = vmatpush1.bf16.msra.mxu0 0
        %998 = vmatprep.subr.bf16.mxu0 0
        %999 = vmatpush1.bf16.msra.mxu0 0
        %1000 = vmatprep.subr.bf16.mxu0 0
        %1001 = vmatpush1.bf16.msra.mxu0 0
        %1002 = vmatprep.subr.bf16.mxu0 0
        %1003 = vmatpush1.bf16.msra.mxu0 0
        %1004 = vmatprep.subr.bf16.mxu0 0
        %1005 = vmatpush1.bf16.msra.mxu0 0
        %1006 = vmatprep.subr.bf16.mxu0 0
        %1007 = vmatpush1.bf16.msra.mxu0 0
        %1008 = vmatprep.subr.bf16.mxu0 0
        %1009 = vmatpush1.bf16.msra.mxu0 0
        %1010 = vmatprep.subr.bf16.mxu0 0
        %1011 = vmatpush1.bf16.msra.mxu0 0
        %1012 = vmatprep.subr.bf16.mxu0 0
        %1013 = vmatpush1.bf16.msra.mxu0 0
        %1014 = vmatprep.mubr.bf16.mxu0 0
        %1015 = vmatmul.mubr.bf16.gmra.mrb[0].mxu0 %v980
        %v1016 = vpop.f32.mrb[0].mxu0
        %v1017 = vadd.f32 %v376, %v1016
        %v1018 = vpop.f32.mrb[0].mxu0
        %v1019 = vadd.f32 %v376, %v1018
        %v1020 = vpop.f32.mrb[0].mxu0
        %v1021 = vpop.f32.mrb[0].mxu0
        %1022 = vdwg.mxu0
        %1023 = vmatprep.subr.bf16.mxu0 %v741
        %1024 = vmatpush1.bf16.msra.mxu0 %v740
        %1025 = vmatprep.subr.bf16.mxu0 %v765
        %1026 = vmatpush1.bf16.msra.mxu0 %v764
        %1027 = vmatprep.subr.bf16.mxu0 %v789
        %1028 = vmatpush1.bf16.msra.mxu0 %v788
        %1029 = vmatprep.subr.bf16.mxu0 %v813
        %1030 = vmatpush1.bf16.msra.mxu0 %v812
        %1031 = vmatprep.subr.bf16.mxu0 %v837
        %1032 = vmatpush1.bf16.msra.mxu0 %v836
        %1033 = vmatprep.subr.bf16.mxu0 0
        %1034 = vmatpush1.bf16.msra.mxu0 0
        %1035 = vmatprep.subr.bf16.mxu0 0
        %1036 = vmatpush1.bf16.msra.mxu0 0
        %1037 = vmatprep.subr.bf16.mxu0 0
        %1038 = vmatpush1.bf16.msra.mxu0 0
        %1039 = vmatprep.subr.bf16.mxu0 0
        %1040 = vmatpush1.bf16.msra.mxu0 0
        %1041 = vmatprep.subr.bf16.mxu0 0
        %1042 = vmatpush1.bf16.msra.mxu0 0
        %1043 = vmatprep.subr.bf16.mxu0 0
        %1044 = vmatpush1.bf16.msra.mxu0 0
        %1045 = vmatprep.subr.bf16.mxu0 0
        %1046 = vmatpush1.bf16.msra.mxu0 0
        %1047 = vmatprep.subr.bf16.mxu0 0
        %1048 = vmatpush1.bf16.msra.mxu0 0
        %1049 = vmatprep.subr.bf16.mxu0 0
        %1050 = vmatpush1.bf16.msra.mxu0 0
        %1051 = vmatprep.subr.bf16.mxu0 0
        %1052 = vmatpush1.bf16.msra.mxu0 0
        %1053 = vmatprep.subr.bf16.mxu0 0
        %1054 = vmatpush1.bf16.msra.mxu0 0
        %1055 = vmatprep.mubr.bf16.mxu0 0
        %1056 = vmatmul.mubr.bf16.gmra.mrb[0].mxu0 %v980
        %v1057 = vpop.f32.mrb[0].mxu0
        %v1058 = vadd.f32 %v376, %v1057
        %v1059 = vpop.f32.mrb[0].mxu0
        %v1060 = vadd.f32 %v376, %v1059
        %v1061 = vpop.f32.mrb[0].mxu0
        %v1062 = vpop.f32.mrb[0].mxu0
        %1063 = vdwg.mxu0
        %1064 = vmatprep.subr.bf16.mxu0 %v743
        %1065 = vmatpush1.bf16.msra.mxu0 %v742
        %1066 = vmatprep.subr.bf16.mxu0 %v767
        %1067 = vmatpush1.bf16.msra.mxu0 %v766
        %1068 = vmatprep.subr.bf16.mxu0 %v791
        %1069 = vmatpush1.bf16.msra.mxu0 %v790
        %1070 = vmatprep.subr.bf16.mxu0 %v815
        %1071 = vmatpush1.bf16.msra.mxu0 %v814
        %1072 = vmatprep.subr.bf16.mxu0 %v839
        %1073 = vmatpush1.bf16.msra.mxu0 %v838
        %1074 = vmatprep.subr.bf16.mxu0 0
        %1075 = vmatpush1.bf16.msra.mxu0 0
        %1076 = vmatprep.subr.bf16.mxu0 0
        %1077 = vmatpush1.bf16.msra.mxu0 0
        %1078 = vmatprep.subr.bf16.mxu0 0
        %1079 = vmatpush1.bf16.msra.mxu0 0
        %1080 = vmatprep.subr.bf16.mxu0 0
        %1081 = vmatpush1.bf16.msra.mxu0 0
        %1082 = vmatprep.subr.bf16.mxu0 0
        %1083 = vmatpush1.bf16.msra.mxu0 0
        %1084 = vmatprep.subr.bf16.mxu0 0
        %1085 = vmatpush1.bf16.msra.mxu0 0
        %1086 = vmatprep.subr.bf16.mxu0 0
        %1087 = vmatpush1.bf16.msra.mxu0 0
        %1088 = vmatprep.subr.bf16.mxu0 0
        %1089 = vmatpush1.bf16.msra.mxu0 0
        %1090 = vmatprep.subr.bf16.mxu0 0
        %1091 = vmatpush1.bf16.msra.mxu0 0
        %1092 = vmatprep.subr.bf16.mxu0 0
        %1093 = vmatpush1.bf16.msra.mxu0 0
        %1094 = vmatprep.subr.bf16.mxu0 0
        %1095 = vmatpush1.bf16.msra.mxu0 0
        %1096 = vmatprep.mubr.bf16.mxu0 0
        %1097 = vmatmul.mubr.bf16.gmra.mrb[0].mxu0 %v980
        %v1098 = vpop.f32.mrb[0].mxu0
        %v1099 = vadd.f32 %v376, %v1098
        %v1100 = vpop.f32.mrb[0].mxu0
        %v1101 = vadd.f32 %v376, %v1100
        %v1102 = vpop.f32.mrb[0].mxu0
        %v1103 = vpop.f32.mrb[0].mxu0
        %1104 = vdwg.mxu0
        %1105 = vmatprep.subr.bf16.mxu0 %v745
        %1106 = vmatpush1.bf16.msra.mxu0 %v744
        %1107 = vmatprep.subr.bf16.mxu0 %v769
        %1108 = vmatpush1.bf16.msra.mxu0 %v768
        %1109 = vmatprep.subr.bf16.mxu0 %v793
        %1110 = vmatpush1.bf16.msra.mxu0 %v792
        %1111 = vmatprep.subr.bf16.mxu0 %v817
        %1112 = vmatpush1.bf16.msra.mxu0 %v816
        %1113 = vmatprep.subr.bf16.mxu0 %v841
        %1114 = vmatpush1.bf16.msra.mxu0 %v840
        %1115 = vmatprep.subr.bf16.mxu0 0
        %1116 = vmatpush1.bf16.msra.mxu0 0
        %1117 = vmatprep.subr.bf16.mxu0 0
        %1118 = vmatpush1.bf16.msra.mxu0 0
        %1119 = vmatprep.subr.bf16.mxu0 0
        %1120 = vmatpush1.bf16.msra.mxu0 0
        %1121 = vmatprep.subr.bf16.mxu0 0
        %1122 = vmatpush1.bf16.msra.mxu0 0
        %1123 = vmatprep.subr.bf16.mxu0 0
        %1124 = vmatpush1.bf16.msra.mxu0 0
        %1125 = vmatprep.subr.bf16.mxu0 0
        %1126 = vmatpush1.bf16.msra.mxu0 0
        %1127 = vmatprep.subr.bf16.mxu0 0
        %1128 = vmatpush1.bf16.msra.mxu0 0
        %1129 = vmatprep.subr.bf16.mxu0 0
        %1130 = vmatpush1.bf16.msra.mxu0 0
        %1131 = vmatprep.subr.bf16.mxu0 0
        %1132 = vmatpush1.bf16.msra.mxu0 0
        %1133 = vmatprep.subr.bf16.mxu0 0
        %1134 = vmatpush1.bf16.msra.mxu0 0
        %1135 = vmatprep.subr.bf16.mxu0 0
        %1136 = vmatpush1.bf16.msra.mxu0 0
        %1137 = vmatprep.mubr.bf16.mxu0 0
        %1138 = vmatmul.mubr.bf16.gmra.mrb[0].mxu0 %v980
        %v1139 = vpop.f32.mrb[0].mxu0
        %v1140 = vadd.f32 %v376, %v1139
        %v1141 = vpop.f32.mrb[0].mxu0
        %v1142 = vadd.f32 %v376, %v1141
        %v1143 = vpop.f32.mrb[0].mxu0
        %v1144 = vpop.f32.mrb[0].mxu0
        %1145 = vdwg.mxu0
        %1146 = vmatprep.subr.bf16.mxu0 %v747
        %1147 = vmatpush1.bf16.msra.mxu0 %v746
        %1148 = vmatprep.subr.bf16.mxu0 %v771
        %1149 = vmatpush1.bf16.msra.mxu0 %v770
        %1150 = vmatprep.subr.bf16.mxu0 %v795
        %1151 = vmatpush1.bf16.msra.mxu0 %v794
        %1152 = vmatprep.subr.bf16.mxu0 %v819
        %1153 = vmatpush1.bf16.msra.mxu0 %v818
        %1154 = vmatprep.subr.bf16.mxu0 %v843
        %1155 = vmatpush1.bf16.msra.mxu0 %v842
        %1156 = vmatprep.subr.bf16.mxu0 0
        %1157 = vmatpush1.bf16.msra.mxu0 0
        %1158 = vmatprep.subr.bf16.mxu0 0
        %1159 = vmatpush1.bf16.msra.mxu0 0
        %1160 = vmatprep.subr.bf16.mxu0 0
        %1161 = vmatpush1.bf16.msra.mxu0 0
        %1162 = vmatprep.subr.bf16.mxu0 0
        %1163 = vmatpush1.bf16.msra.mxu0 0
        %1164 = vmatprep.subr.bf16.mxu0 0
        %1165 = vmatpush1.bf16.msra.mxu0 0
        %1166 = vmatprep.subr.bf16.mxu0 0
        %1167 = vmatpush1.bf16.msra.mxu0 0
        %1168 = vmatprep.subr.bf16.mxu0 0
        %1169 = vmatpush1.bf16.msra.mxu0 0
        %1170 = vmatprep.subr.bf16.mxu0 0
        %1171 = vmatpush1.bf16.msra.mxu0 0
        %1172 = vmatprep.subr.bf16.mxu0 0
        %1173 = vmatpush1.bf16.msra.mxu0 0
        %1174 = vmatprep.subr.bf16.mxu0 0
        %1175 = vmatpush1.bf16.msra.mxu0 0
        %1176 = vmatprep.subr.bf16.mxu0 0
        %1177 = vmatpush1.bf16.msra.mxu0 0
        %1178 = vmatprep.mubr.bf16.mxu0 0
        %1179 = vmatmul.mubr.bf16.gmra.mrb[0].mxu0 %v980
        %v1180 = vpop.f32.mrb[0].mxu0
        %v1181 = vadd.f32 %v376, %v1180
        %v1182 = vpop.f32.mrb[0].mxu0
        %v1183 = vadd.f32 %v376, %v1182
        %v1184 = vpop.f32.mrb[0].mxu0
        %v1185 = vpop.f32.mrb[0].mxu0
        %1186 = vdwg.mxu0
        %1187 = vmatprep.subr.bf16.mxu0 %v749
        %1188 = vmatpush1.bf16.msra.mxu0 %v748
        %1189 = vmatprep.subr.bf16.mxu0 %v773
        %1190 = vmatpush1.bf16.msra.mxu0 %v772
        %1191 = vmatprep.subr.bf16.mxu0 %v797
        %1192 = vmatpush1.bf16.msra.mxu0 %v796
        %1193 = vmatprep.subr.bf16.mxu0 %v821
        %1194 = vmatpush1.bf16.msra.mxu0 %v820
        %1195 = vmatprep.subr.bf16.mxu0 %v845
        %1196 = vmatpush1.bf16.msra.mxu0 %v844
        %1197 = vmatprep.subr.bf16.mxu0 0
        %1198 = vmatpush1.bf16.msra.mxu0 0
        %1199 = vmatprep.subr.bf16.mxu0 0
        %1200 = vmatpush1.bf16.msra.mxu0 0
        %1201 = vmatprep.subr.bf16.mxu0 0
        %1202 = vmatpush1.bf16.msra.mxu0 0
        %1203 = vmatprep.subr.bf16.mxu0 0
        %1204 = vmatpush1.bf16.msra.mxu0 0
        %1205 = vmatprep.subr.bf16.mxu0 0
        %1206 = vmatpush1.bf16.msra.mxu0 0
        %1207 = vmatprep.subr.bf16.mxu0 0
        %1208 = vmatpush1.bf16.msra.mxu0 0
        %1209 = vmatprep.subr.bf16.mxu0 0
        %1210 = vmatpush1.bf16.msra.mxu0 0
        %1211 = vmatprep.subr.bf16.mxu0 0
        %1212 = vmatpush1.bf16.msra.mxu0 0
        %1213 = vmatprep.subr.bf16.mxu0 0
        %1214 = vmatpush1.bf16.msra.mxu0 0
        %1215 = vmatprep.subr.bf16.mxu0 0
        %1216 = vmatpush1.bf16.msra.mxu0 0
        %1217 = vmatprep.subr.bf16.mxu0 0
        %1218 = vmatpush1.bf16.msra.mxu0 0
        %1219 = vmatprep.mubr.bf16.mxu0 0
        %1220 = vmatmul.mubr.bf16.gmra.mrb[0].mxu0 %v980
        %v1221 = vpop.f32.mrb[0].mxu0
        %v1222 = vadd.f32 %v376, %v1221
        %v1223 = vpop.f32.mrb[0].mxu0
        %v1224 = vadd.f32 %v376, %v1223
        %v1225 = vpop.f32.mrb[0].mxu0
        %v1226 = vpop.f32.mrb[0].mxu0
        %1227 = vdwg.mxu0
        %1228 = vmatprep.subr.bf16.mxu0 %v751
        %1229 = vmatpush1.bf16.msra.mxu0 %v750
        %1230 = vmatprep.subr.bf16.mxu0 %v775
        %1231 = vmatpush1.bf16.msra.mxu0 %v774
        %1232 = vmatprep.subr.bf16.mxu0 %v799
        %1233 = vmatpush1.bf16.msra.mxu0 %v798
        %1234 = vmatprep.subr.bf16.mxu0 %v823
        %1235 = vmatpush1.bf16.msra.mxu0 %v822
        %1236 = vmatprep.subr.bf16.mxu0 %v847
        %1237 = vmatpush1.bf16.msra.mxu0 %v846
        %1238 = vmatprep.subr.bf16.mxu0 0
        %1239 = vmatpush1.bf16.msra.mxu0 0
        %1240 = vmatprep.subr.bf16.mxu0 0
        %1241 = vmatpush1.bf16.msra.mxu0 0
        %1242 = vmatprep.subr.bf16.mxu0 0
        %1243 = vmatpush1.bf16.msra.mxu0 0
        %1244 = vmatprep.subr.bf16.mxu0 0
        %1245 = vmatpush1.bf16.msra.mxu0 0
        %1246 = vmatprep.subr.bf16.mxu0 0
        %1247 = vmatpush1.bf16.msra.mxu0 0
        %1248 = vmatprep.subr.bf16.mxu0 0
        %1249 = vmatpush1.bf16.msra.mxu0 0
        %1250 = vmatprep.subr.bf16.mxu0 0
        %1251 = vmatpush1.bf16.msra.mxu0 0
        %1252 = vmatprep.subr.bf16.mxu0 0
        %1253 = vmatpush1.bf16.msra.mxu0 0
        %1254 = vmatprep.subr.bf16.mxu0 0
        %1255 = vmatpush1.bf16.msra.mxu0 0
        %1256 = vmatprep.subr.bf16.mxu0 0
        %1257 = vmatpush1.bf16.msra.mxu0 0
        %1258 = vmatprep.subr.bf16.mxu0 0
        %1259 = vmatpush1.bf16.msra.mxu0 0
        %1260 = vmatprep.mubr.bf16.mxu0 0
        %1261 = vmatmul.mubr.bf16.gmra.mrb[0].mxu0 %v980
        %v1262 = vpop.f32.mrb[0].mxu0
        %v1263 = vadd.f32 %v376, %v1262
        %v1264 = vpop.f32.mrb[0].mxu0
        %v1265 = vadd.f32 %v376, %v1264
        %v1266 = vpop.f32.mrb[0].mxu0
        %v1267 = vpop.f32.mrb[0].mxu0
        %1268 = vdwg.mxu0
        %1269 = vmatprep.subr.bf16.mxu0 %v753
        %1270 = vmatpush1.bf16.msra.mxu0 %v752
        %1271 = vmatprep.subr.bf16.mxu0 %v777
        %1272 = vmatpush1.bf16.msra.mxu0 %v776
        %1273 = vmatprep.subr.bf16.mxu0 %v801
        %1274 = vmatpush1.bf16.msra.mxu0 %v800
        %1275 = vmatprep.subr.bf16.mxu0 %v825
        %1276 = vmatpush1.bf16.msra.mxu0 %v824
        %1277 = vmatprep.subr.bf16.mxu0 %v849
        %1278 = vmatpush1.bf16.msra.mxu0 %v848
        %1279 = vmatprep.subr.bf16.mxu0 0
        %1280 = vmatpush1.bf16.msra.mxu0 0
        %1281 = vmatprep.subr.bf16.mxu0 0
        %1282 = vmatpush1.bf16.msra.mxu0 0
        %1283 = vmatprep.subr.bf16.mxu0 0
        %1284 = vmatpush1.bf16.msra.mxu0 0
        %1285 = vmatprep.subr.bf16.mxu0 0
        %1286 = vmatpush1.bf16.msra.mxu0 0
        %1287 = vmatprep.subr.bf16.mxu0 0
        %1288 = vmatpush1.bf16.msra.mxu0 0
        %1289 = vmatprep.subr.bf16.mxu0 0
        %1290 = vmatpush1.bf16.msra.mxu0 0
        %1291 = vmatprep.subr.bf16.mxu0 0
        %1292 = vmatpush1.bf16.msra.mxu0 0
        %1293 = vmatprep.subr.bf16.mxu0 0
        %1294 = vmatpush1.bf16.msra.mxu0 0
        %1295 = vmatprep.subr.bf16.mxu0 0
        %1296 = vmatpush1.bf16.msra.mxu0 0
        %1297 = vmatprep.subr.bf16.mxu0 0
        %1298 = vmatpush1.bf16.msra.mxu0 0
        %1299 = vmatprep.subr.bf16.mxu0 0
        %1300 = vmatpush1.bf16.msra.mxu0 0
        %1301 = vmatprep.mubr.bf16.mxu0 0
        %1302 = vmatmul.mubr.bf16.gmra.mrb[0].mxu0 %v980
        %v1303 = vpop.f32.mrb[0].mxu0
        %v1304 = vadd.f32 %v376, %v1303
        %v1305 = vpop.f32.mrb[0].mxu0
        %v1306 = vadd.f32 %v376, %v1305
        %v1307 = vpop.f32.mrb[0].mxu0
        %v1308 = vpop.f32.mrb[0].mxu0
        %1309 = vdwg.mxu0
        %1310 = vmatprep.subr.bf16.mxu0 %v755
        %1311 = vmatpush1.bf16.msra.mxu0 %v754
        %1312 = vmatprep.subr.bf16.mxu0 %v779
        %1313 = vmatpush1.bf16.msra.mxu0 %v778
        %1314 = vmatprep.subr.bf16.mxu0 %v803
        %1315 = vmatpush1.bf16.msra.mxu0 %v802
        %1316 = vmatprep.subr.bf16.mxu0 %v827
        %1317 = vmatpush1.bf16.msra.mxu0 %v826
        %1318 = vmatprep.subr.bf16.mxu0 %v851
        %1319 = vmatpush1.bf16.msra.mxu0 %v850
        %1320 = vmatprep.subr.bf16.mxu0 0
        %1321 = vmatpush1.bf16.msra.mxu0 0
        %1322 = vmatprep.subr.bf16.mxu0 0
        %1323 = vmatpush1.bf16.msra.mxu0 0
        %1324 = vmatprep.subr.bf16.mxu0 0
        %1325 = vmatpush1.bf16.msra.mxu0 0
        %1326 = vmatprep.subr.bf16.mxu0 0
        %1327 = vmatpush1.bf16.msra.mxu0 0
        %1328 = vmatprep.subr.bf16.mxu0 0
        %1329 = vmatpush1.bf16.msra.mxu0 0
        %1330 = vmatprep.subr.bf16.mxu0 0
        %1331 = vmatpush1.bf16.msra.mxu0 0
        %1332 = vmatprep.subr.bf16.mxu0 0
        %1333 = vmatpush1.bf16.msra.mxu0 0
        %1334 = vmatprep.subr.bf16.mxu0 0
        %1335 = vmatpush1.bf16.msra.mxu0 0
        %1336 = vmatprep.subr.bf16.mxu0 0
        %1337 = vmatpush1.bf16.msra.mxu0 0
        %1338 = vmatprep.subr.bf16.mxu0 0
        %1339 = vmatpush1.bf16.msra.mxu0 0
        %1340 = vmatprep.subr.bf16.mxu0 0
        %1341 = vmatpush1.bf16.msra.mxu0 0
        %1342 = vmatprep.mubr.bf16.mxu0 0
        %1343 = vmatmul.mubr.bf16.gmra.mrb[0].mxu0 %v980
        %v1344 = vpop.f32.mrb[0].mxu0
        %v1345 = vadd.f32 %v376, %v1344
        %v1346 = vpop.f32.mrb[0].mxu0
        %v1347 = vadd.f32 %v376, %v1346
        %v1348 = vpop.f32.mrb[0].mxu0
        %v1349 = vpop.f32.mrb[0].mxu0
        %1350 = vdwg.mxu0
        %1351 = vmatprep.subr.bf16.mxu0 %v757
        %1352 = vmatpush1.bf16.msra.mxu0 %v756
        %1353 = vmatprep.subr.bf16.mxu0 %v781
        %1354 = vmatpush1.bf16.msra.mxu0 %v780
        %1355 = vmatprep.subr.bf16.mxu0 %v805
        %1356 = vmatpush1.bf16.msra.mxu0 %v804
        %1357 = vmatprep.subr.bf16.mxu0 %v829
        %1358 = vmatpush1.bf16.msra.mxu0 %v828
        %1359 = vmatprep.subr.bf16.mxu0 %v853
        %1360 = vmatpush1.bf16.msra.mxu0 %v852
        %1361 = vmatprep.subr.bf16.mxu0 0
        %1362 = vmatpush1.bf16.msra.mxu0 0
        %1363 = vmatprep.subr.bf16.mxu0 0
        %1364 = vmatpush1.bf16.msra.mxu0 0
        %1365 = vmatprep.subr.bf16.mxu0 0
        %1366 = vmatpush1.bf16.msra.mxu0 0
        %1367 = vmatprep.subr.bf16.mxu0 0
        %1368 = vmatpush1.bf16.msra.mxu0 0
        %1369 = vmatprep.subr.bf16.mxu0 0
        %1370 = vmatpush1.bf16.msra.mxu0 0
        %1371 = vmatprep.subr.bf16.mxu0 0
        %1372 = vmatpush1.bf16.msra.mxu0 0
        %1373 = vmatprep.subr.bf16.mxu0 0
        %1374 = vmatpush1.bf16.msra.mxu0 0
        %1375 = vmatprep.subr.bf16.mxu0 0
        %1376 = vmatpush1.bf16.msra.mxu0 0
        %1377 = vmatprep.subr.bf16.mxu0 0
        %1378 = vmatpush1.bf16.msra.mxu0 0
        %1379 = vmatprep.subr.bf16.mxu0 0
        %1380 = vmatpush1.bf16.msra.mxu0 0
        %1381 = vmatprep.subr.bf16.mxu0 0
        %1382 = vmatpush1.bf16.msra.mxu0 0
        %1383 = vmatprep.mubr.bf16.mxu0 0
        %1384 = vmatmul.mubr.bf16.gmra.mrb[0].mxu0 %v980
        %v1385 = vpop.f32.mrb[0].mxu0
        %v1386 = vadd.f32 %v376, %v1385
        %v1387 = vpop.f32.mrb[0].mxu0
        %v1388 = vadd.f32 %v376, %v1387
        %v1389 = vpop.f32.mrb[0].mxu0
        %v1390 = vpop.f32.mrb[0].mxu0
        %1391 = vdwg.mxu0
        %1392 = vmatprep.subr.bf16.mxu0 %v759
        %1393 = vmatpush1.bf16.msra.mxu0 %v758
        %1394 = vmatprep.subr.bf16.mxu0 %v783
        %1395 = vmatpush1.bf16.msra.mxu0 %v782
        %1396 = vmatprep.subr.bf16.mxu0 %v807
        %1397 = vmatpush1.bf16.msra.mxu0 %v806
        %1398 = vmatprep.subr.bf16.mxu0 %v831
        %1399 = vmatpush1.bf16.msra.mxu0 %v830
        %1400 = vmatprep.subr.bf16.mxu0 %v855
        %1401 = vmatpush1.bf16.msra.mxu0 %v854
        %1402 = vmatprep.subr.bf16.mxu0 0
        %1403 = vmatpush1.bf16.msra.mxu0 0
        %1404 = vmatprep.subr.bf16.mxu0 0
        %1405 = vmatpush1.bf16.msra.mxu0 0
        %1406 = vmatprep.subr.bf16.mxu0 0
        %1407 = vmatpush1.bf16.msra.mxu0 0
        %1408 = vmatprep.subr.bf16.mxu0 0
        %1409 = vmatpush1.bf16.msra.mxu0 0
        %1410 = vmatprep.subr.bf16.mxu0 0
        %1411 = vmatpush1.bf16.msra.mxu0 0
        %1412 = vmatprep.subr.bf16.mxu0 0
        %1413 = vmatpush1.bf16.msra.mxu0 0
        %1414 = vmatprep.subr.bf16.mxu0 0
        %1415 = vmatpush1.bf16.msra.mxu0 0
        %1416 = vmatprep.subr.bf16.mxu0 0
        %1417 = vmatpush1.bf16.msra.mxu0 0
        %1418 = vmatprep.subr.bf16.mxu0 0
        %1419 = vmatpush1.bf16.msra.mxu0 0
        %1420 = vmatprep.subr.bf16.mxu0 0
        %1421 = vmatpush1.bf16.msra.mxu0 0
        %1422 = vmatprep.subr.bf16.mxu0 0
        %1423 = vmatpush1.bf16.msra.mxu0 0
        %1424 = vmatprep.mubr.bf16.mxu0 0
        %1425 = vmatmul.mubr.bf16.gmra.mrb[0].mxu0 %v980
        %v1426 = vpop.f32.mrb[0].mxu0
        %v1427 = vadd.f32 %v376, %v1426
        %v1428 = vpop.f32.mrb[0].mxu0
        %v1429 = vadd.f32 %v376, %v1428
        %v1430 = vpop.f32.mrb[0].mxu0
        %v1431 = vpop.f32.mrb[0].mxu0
        %1432 = vdwg.mxu0
        %1433 = vmatprep.subr.bf16.mxu0 %v761
        %1434 = vmatpush1.bf16.msra.mxu0 %v760
        %1435 = vmatprep.subr.bf16.mxu0 %v785
        %1436 = vmatpush1.bf16.msra.mxu0 %v784
        %1437 = vmatprep.subr.bf16.mxu0 %v809
        %1438 = vmatpush1.bf16.msra.mxu0 %v808
        %1439 = vmatprep.subr.bf16.mxu0 %v833
        %1440 = vmatpush1.bf16.msra.mxu0 %v832
        %1441 = vmatprep.subr.bf16.mxu0 %v857
        %1442 = vmatpush1.bf16.msra.mxu0 %v856
        %1443 = vmatprep.subr.bf16.mxu0 0
        %1444 = vmatpush1.bf16.msra.mxu0 0
        %1445 = vmatprep.subr.bf16.mxu0 0
        %1446 = vmatpush1.bf16.msra.mxu0 0
        %1447 = vmatprep.subr.bf16.mxu0 0
        %1448 = vmatpush1.bf16.msra.mxu0 0
        %1449 = vmatprep.subr.bf16.mxu0 0
        %1450 = vmatpush1.bf16.msra.mxu0 0
        %1451 = vmatprep.subr.bf16.mxu0 0
        %1452 = vmatpush1.bf16.msra.mxu0 0
        %1453 = vmatprep.subr.bf16.mxu0 0
        %1454 = vmatpush1.bf16.msra.mxu0 0
        %1455 = vmatprep.subr.bf16.mxu0 0
        %1456 = vmatpush1.bf16.msra.mxu0 0
        %1457 = vmatprep.subr.bf16.mxu0 0
        %1458 = vmatpush1.bf16.msra.mxu0 0
        %1459 = vmatprep.subr.bf16.mxu0 0
        %1460 = vmatpush1.bf16.msra.mxu0 0
        %1461 = vmatprep.subr.bf16.mxu0 0
        %1462 = vmatpush1.bf16.msra.mxu0 0
        %1463 = vmatprep.subr.bf16.mxu0 0
        %1464 = vmatpush1.bf16.msra.mxu0 0
        %1465 = vmatprep.mubr.bf16.mxu0 0
        %1466 = vmatmul.mubr.bf16.gmra.mrb[0].mxu0 %v980
        %v1467 = vpop.f32.mrb[0].mxu0
        %v1468 = vadd.f32 %v376, %v1467
        %v1469 = vpop.f32.mrb[0].mxu0
        %v1470 = vadd.f32 %v376, %v1469
        %v1471 = vpop.f32.mrb[0].mxu0
        %v1472 = vpop.f32.mrb[0].mxu0
        %1473 = vdwg.mxu0
        %v1474 = vmax.f32 %v1017, 0.0
        %v1475 = vmax.f32 %v1019, 0.0
        %v1476 = vmax.f32 %v1058, 0.0
        %v1477 = vmax.f32 %v1060, 0.0
        %v1478 = vmax.f32 %v1099, 0.0
        %v1479 = vmax.f32 %v1101, 0.0
        %v1480 = vmax.f32 %v1140, 0.0
        %v1481 = vmax.f32 %v1142, 0.0
        %v1482 = vmax.f32 %v1181, 0.0
        %v1483 = vmax.f32 %v1183, 0.0
        %v1484 = vmax.f32 %v1222, 0.0
        %v1485 = vmax.f32 %v1224, 0.0
        %v1486 = vmax.f32 %v1263, 0.0
        %v1487 = vmax.f32 %v1265, 0.0
        %v1488 = vmax.f32 %v1304, 0.0
        %v1489 = vmax.f32 %v1306, 0.0
        %v1490 = vmax.f32 %v1345, 0.0
        %v1491 = vmax.f32 %v1347, 0.0
        %v1492 = vmax.f32 %v1386, 0.0
        %v1493 = vmax.f32 %v1388, 0.0
        %v1494 = vmax.f32 %v1427, 0.0
        %v1495 = vmax.f32 %v1429, 0.0
        %v1496 = vmax.f32 %v1468, 0.0
        %v1497 = vmax.f32 %v1470, 0.0
        %v1498 = vld [vmem:[%s3] sm:$0xff]
        %v1499 = vld [vmem:[%s3 + $0x8] sm:$0xff]
        %v1500 = vld [vmem:[%s3 + $0x10] sm:$0xff]
        %v1501 = vld [vmem:[%s3 + $0x18] sm:$0xff]
        %v1502 = vld [vmem:[%s3 + $0x20] sm:$0xff]
        %v1503 = vld [vmem:[%s3 + $0x28] sm:$0xff]
        %v1504 = vld [vmem:[%s3 + $0x30] sm:$0xff]
        %v1505 = vld [vmem:[%s3 + $0x38] sm:$0xff]
        %v1506 = vld [vmem:[%s3 + $0x40] sm:$0xff]
        %v1507 = vld [vmem:[%s3 + $0x48] sm:$0xff]
        %v1508 = vld [vmem:[%s3 + $0x50] sm:$0xff]
        %v1509 = vld [vmem:[%s3 + $0x58] sm:$0xff]
        %v1510 = vld [vmem:[%s3 + $0x60] sm:$0xff]
        %v1511 = vld [vmem:[%s3 + $0x68] sm:$0xff]
        %v1512 = vld [vmem:[%s3 + $0x70] sm:$0xff]
        %v1513 = vld [vmem:[%s3 + $0x78] sm:$0xff]
        %v1514 = vld [vmem:[%s3 + $0x80] sm:$0xff]
        %v1515 = vld [vmem:[%s3 + $0x88] sm:$0xff]
        %v1516 = vld [vmem:[%s3 + $0x90] sm:$0xff]
        %v1517 = vld [vmem:[%s3 + $0x98] sm:$0xff]
        %v1518 = vld [vmem:[%s3 + $0xa0] sm:$0xff]
        %v1519 = vld [vmem:[%s3 + $0xa8] sm:$0xff]
        %v1520 = vld [vmem:[%s3 + $0xb0] sm:$0xff]
        %v1521 = vld [vmem:[%s3 + $0xb8] sm:$0xff]
        %1522 = vmatprep.subr.mxu0 %v1475
        %1523 = vmatpush1.xpose.msra.mxu0 %v1474
        %1524 = vmatprep.subr.mxu0 0.0
        %1525 = vmatpush1.xpose.msra.mxu0 0.0
        %1526 = vmatprep.subr.mxu0 0.0
        %1527 = vmatpush1.xpose.msra.mxu0 0.0
        %1528 = vmatprep.subr.mxu0 0.0
        %1529 = vmatpush1.xpose.msra.mxu0 0.0
        %1530 = vmatprep.subr.mxu0 0.0
        %1531 = vmatpush1.xpose.msra.mxu0 0.0
        %1532 = vmatprep.subr.mxu0 0.0
        %1533 = vmatpush1.xpose.msra.mxu0 0.0
        %1534 = vmatprep.subr.mxu0 0.0
        %1535 = vmatpush1.xpose.msra.mxu0 0.0
        %1536 = vmatprep.subr.mxu0 0.0
        %1537 = vmatpush1.xpose.msra.mxu0 0.0
        %1538 = vmatprep.subr.mxu0 0.0
        %1539 = vmatpush1.xpose.msra.mxu0 0.0
        %1540 = vmatprep.subr.mxu0 0.0
        %1541 = vmatpush1.xpose.msra.mxu0 0.0
        %1542 = vmatprep.subr.mxu0 0.0
        %1543 = vmatpush1.xpose.msra.mxu0 0.0
        %1544 = vmatprep.subr.mxu0 0.0
        %1545 = vmatpush1.xpose.msra.mxu0 0.0
        %1546 = vmatprep.subr.mxu0 0.0
        %1547 = vmatpush1.xpose.msra.mxu0 0.0
        %1548 = vmatprep.subr.mxu0 0.0
        %1549 = vmatpush1.xpose.msra.mxu0 0.0
        %1550 = vmatprep.subr.mxu0 0.0
        %1551 = vmatpush1.xpose.msra.mxu0 0.0
        %1552 = vmatprep.subr.mxu0 0.0
        %1553 = vmatpush1.xpose.msra.mxu0 0.0
        %1554 = vmatprep.subr.mxu0 0.0
        %1555 = vmatpush1.xpose.msra.mxu0 0.0
        %1556 = vmatprep.subr.mxu0 0.0
        %1557 = vmatpush1.xpose.msra.mxu0 0.0
        %1558 = vmatprep.subr.mxu0 0.0
        %1559 = vmatpush1.xpose.msra.mxu0 0.0
        %1560 = vmatprep.subr.mxu0 0.0
        %1561 = vmatpush1.xpose.msra.mxu0 0.0
        %1562 = vmatprep.subr.mxu0 0.0
        %1563 = vmatpush1.xpose.msra.mxu0 0.0
        %1564 = vmatprep.subr.mxu0 0.0
        %1565 = vmatpush1.xpose.msra.mxu0 0.0
        %1566 = vmatprep.subr.mxu0 0.0
        %1567 = vmatpush1.xpose.msra.mxu0 0.0
        %1568 = vmatprep.subr.mxu0 0.0
        %1569 = vmatpush1.xpose.msra.mxu0 0.0
        %1570 = vmatprep.subr.mxu0 0.0
        %1571 = vmatpush1.xpose.msra.mxu0 0.0
        %1572 = vmatprep.subr.mxu0 0.0
        %1573 = vmatpush1.xpose.msra.mxu0 0.0
        %1574 = vmatprep.subr.mxu0 0.0
        %1575 = vmatpush1.xpose.msra.mxu0 0.0
        %1576 = vmatprep.subr.mxu0 0.0
        %1577 = vmatpush1.xpose.msra.mxu0 0.0
        %1578 = vmatprep.subr.mxu0 0.0
        %1579 = vmatpush1.xpose.msra.mxu0 0.0
        %1580 = vmatprep.subr.mxu0 0.0
        %1581 = vmatpush1.xpose.msra.mxu0 0.0
        %1582 = vmatprep.subr.mxu0 0.0
        %1583 = vmatpush1.xpose.msra.mxu0 0.0
        %1584 = vmatprep.subr.mxu0 0.0
        %1585 = vmatpush1.xpose.msra.mxu0 0.0
        %1586 = vmatprep.mubr.f32.mxu0 %v1499
        %1587 = vmatmul.mubr.f32.gmra.mrb[0].mxu0 %v1498
        %v1588 = vpop.f32.mrb[0].mxu0
        %v1589 = vadd.f32 0.0, %v1588
        %v1590 = vpop.f32.mrb[0].mxu0
        %1591 = vdwg.mxu0
        %1592 = vmatprep.subr.mxu0 %v1477
        %1593 = vmatpush1.xpose.msra.mxu0 %v1476
        %1594 = vmatprep.subr.mxu0 0.0
        %1595 = vmatpush1.xpose.msra.mxu0 0.0
        %1596 = vmatprep.subr.mxu0 0.0
        %1597 = vmatpush1.xpose.msra.mxu0 0.0
        %1598 = vmatprep.subr.mxu0 0.0
        %1599 = vmatpush1.xpose.msra.mxu0 0.0
        %1600 = vmatprep.subr.mxu0 0.0
        %1601 = vmatpush1.xpose.msra.mxu0 0.0
        %1602 = vmatprep.subr.mxu0 0.0
        %1603 = vmatpush1.xpose.msra.mxu0 0.0
        %1604 = vmatprep.subr.mxu0 0.0
        %1605 = vmatpush1.xpose.msra.mxu0 0.0
        %1606 = vmatprep.subr.mxu0 0.0
        %1607 = vmatpush1.xpose.msra.mxu0 0.0
        %1608 = vmatprep.subr.mxu0 0.0
        %1609 = vmatpush1.xpose.msra.mxu0 0.0
        %1610 = vmatprep.subr.mxu0 0.0
        %1611 = vmatpush1.xpose.msra.mxu0 0.0
        %1612 = vmatprep.subr.mxu0 0.0
        %1613 = vmatpush1.xpose.msra.mxu0 0.0
        %1614 = vmatprep.subr.mxu0 0.0
        %1615 = vmatpush1.xpose.msra.mxu0 0.0
        %1616 = vmatprep.subr.mxu0 0.0
        %1617 = vmatpush1.xpose.msra.mxu0 0.0
        %1618 = vmatprep.subr.mxu0 0.0
        %1619 = vmatpush1.xpose.msra.mxu0 0.0
        %1620 = vmatprep.subr.mxu0 0.0
        %1621 = vmatpush1.xpose.msra.mxu0 0.0
        %1622 = vmatprep.subr.mxu0 0.0
        %1623 = vmatpush1.xpose.msra.mxu0 0.0
        %1624 = vmatprep.subr.mxu0 0.0
        %1625 = vmatpush1.xpose.msra.mxu0 0.0
        %1626 = vmatprep.subr.mxu0 0.0
        %1627 = vmatpush1.xpose.msra.mxu0 0.0
        %1628 = vmatprep.subr.mxu0 0.0
        %1629 = vmatpush1.xpose.msra.mxu0 0.0
        %1630 = vmatprep.subr.mxu0 0.0
        %1631 = vmatpush1.xpose.msra.mxu0 0.0
        %1632 = vmatprep.subr.mxu0 0.0
        %1633 = vmatpush1.xpose.msra.mxu0 0.0
        %1634 = vmatprep.subr.mxu0 0.0
        %1635 = vmatpush1.xpose.msra.mxu0 0.0
        %1636 = vmatprep.subr.mxu0 0.0
        %1637 = vmatpush1.xpose.msra.mxu0 0.0
        %1638 = vmatprep.subr.mxu0 0.0
        %1639 = vmatpush1.xpose.msra.mxu0 0.0
        %1640 = vmatprep.subr.mxu0 0.0
        %1641 = vmatpush1.xpose.msra.mxu0 0.0
        %1642 = vmatprep.subr.mxu0 0.0
        %1643 = vmatpush1.xpose.msra.mxu0 0.0
        %1644 = vmatprep.subr.mxu0 0.0
        %1645 = vmatpush1.xpose.msra.mxu0 0.0
        %1646 = vmatprep.subr.mxu0 0.0
        %1647 = vmatpush1.xpose.msra.mxu0 0.0
        %1648 = vmatprep.subr.mxu0 0.0
        %1649 = vmatpush1.xpose.msra.mxu0 0.0
        %1650 = vmatprep.subr.mxu0 0.0
        %1651 = vmatpush1.xpose.msra.mxu0 0.0
        %1652 = vmatprep.subr.mxu0 0.0
        %1653 = vmatpush1.xpose.msra.mxu0 0.0
        %1654 = vmatprep.subr.mxu0 0.0
        %1655 = vmatpush1.xpose.msra.mxu0 0.0
        %1656 = vmatprep.mubr.f32.mxu0 %v1501
        %1657 = vmatmul.mubr.f32.gmra.mrb[0].mxu0 %v1500
        %v1658 = vpop.f32.mrb[0].mxu0
        %v1659 = vadd.f32 %v1589, %v1658
        %v1660 = vpop.f32.mrb[0].mxu0
        %1661 = vdwg.mxu0
        %1662 = vmatprep.subr.mxu0 %v1479
        %1663 = vmatpush1.xpose.msra.mxu0 %v1478
        %1664 = vmatprep.subr.mxu0 0.0
        %1665 = vmatpush1.xpose.msra.mxu0 0.0
        %1666 = vmatprep.subr.mxu0 0.0
        %1667 = vmatpush1.xpose.msra.mxu0 0.0
        %1668 = vmatprep.subr.mxu0 0.0
        %1669 = vmatpush1.xpose.msra.mxu0 0.0
        %1670 = vmatprep.subr.mxu0 0.0
        %1671 = vmatpush1.xpose.msra.mxu0 0.0
        %1672 = vmatprep.subr.mxu0 0.0
        %1673 = vmatpush1.xpose.msra.mxu0 0.0
        %1674 = vmatprep.subr.mxu0 0.0
        %1675 = vmatpush1.xpose.msra.mxu0 0.0
        %1676 = vmatprep.subr.mxu0 0.0
        %1677 = vmatpush1.xpose.msra.mxu0 0.0
        %1678 = vmatprep.subr.mxu0 0.0
        %1679 = vmatpush1.xpose.msra.mxu0 0.0
        %1680 = vmatprep.subr.mxu0 0.0
        %1681 = vmatpush1.xpose.msra.mxu0 0.0
        %1682 = vmatprep.subr.mxu0 0.0
        %1683 = vmatpush1.xpose.msra.mxu0 0.0
        %1684 = vmatprep.subr.mxu0 0.0
        %1685 = vmatpush1.xpose.msra.mxu0 0.0
        %1686 = vmatprep.subr.mxu0 0.0
        %1687 = vmatpush1.xpose.msra.mxu0 0.0
        %1688 = vmatprep.subr.mxu0 0.0
        %1689 = vmatpush1.xpose.msra.mxu0 0.0
        %1690 = vmatprep.subr.mxu0 0.0
        %1691 = vmatpush1.xpose.msra.mxu0 0.0
        %1692 = vmatprep.subr.mxu0 0.0
        %1693 = vmatpush1.xpose.msra.mxu0 0.0
        %1694 = vmatprep.subr.mxu0 0.0
        %1695 = vmatpush1.xpose.msra.mxu0 0.0
        %1696 = vmatprep.subr.mxu0 0.0
        %1697 = vmatpush1.xpose.msra.mxu0 0.0
        %1698 = vmatprep.subr.mxu0 0.0
        %1699 = vmatpush1.xpose.msra.mxu0 0.0
        %1700 = vmatprep.subr.mxu0 0.0
        %1701 = vmatpush1.xpose.msra.mxu0 0.0
        %1702 = vmatprep.subr.mxu0 0.0
        %1703 = vmatpush1.xpose.msra.mxu0 0.0
        %1704 = vmatprep.subr.mxu0 0.0
        %1705 = vmatpush1.xpose.msra.mxu0 0.0
        %1706 = vmatprep.subr.mxu0 0.0
        %1707 = vmatpush1.xpose.msra.mxu0 0.0
        %1708 = vmatprep.subr.mxu0 0.0
        %1709 = vmatpush1.xpose.msra.mxu0 0.0
        %1710 = vmatprep.subr.mxu0 0.0
        %1711 = vmatpush1.xpose.msra.mxu0 0.0
        %1712 = vmatprep.subr.mxu0 0.0
        %1713 = vmatpush1.xpose.msra.mxu0 0.0
        %1714 = vmatprep.subr.mxu0 0.0
        %1715 = vmatpush1.xpose.msra.mxu0 0.0
        %1716 = vmatprep.subr.mxu0 0.0
        %1717 = vmatpush1.xpose.msra.mxu0 0.0
        %1718 = vmatprep.subr.mxu0 0.0
        %1719 = vmatpush1.xpose.msra.mxu0 0.0
        %1720 = vmatprep.subr.mxu0 0.0
        %1721 = vmatpush1.xpose.msra.mxu0 0.0
        %1722 = vmatprep.subr.mxu0 0.0
        %1723 = vmatpush1.xpose.msra.mxu0 0.0
        %1724 = vmatprep.subr.mxu0 0.0
        %1725 = vmatpush1.xpose.msra.mxu0 0.0
        %1726 = vmatprep.mubr.f32.mxu0 %v1503
        %1727 = vmatmul.mubr.f32.gmra.mrb[0].mxu0 %v1502
        %v1728 = vpop.f32.mrb[0].mxu0
        %v1729 = vadd.f32 %v1659, %v1728
        %v1730 = vpop.f32.mrb[0].mxu0
        %1731 = vdwg.mxu0
        %1732 = vmatprep.subr.mxu0 %v1481
        %1733 = vmatpush1.xpose.msra.mxu0 %v1480
        %1734 = vmatprep.subr.mxu0 0.0
        %1735 = vmatpush1.xpose.msra.mxu0 0.0
        %1736 = vmatprep.subr.mxu0 0.0
        %1737 = vmatpush1.xpose.msra.mxu0 0.0
        %1738 = vmatprep.subr.mxu0 0.0
        %1739 = vmatpush1.xpose.msra.mxu0 0.0
        %1740 = vmatprep.subr.mxu0 0.0
        %1741 = vmatpush1.xpose.msra.mxu0 0.0
        %1742 = vmatprep.subr.mxu0 0.0
        %1743 = vmatpush1.xpose.msra.mxu0 0.0
        %1744 = vmatprep.subr.mxu0 0.0
        %1745 = vmatpush1.xpose.msra.mxu0 0.0
        %1746 = vmatprep.subr.mxu0 0.0
        %1747 = vmatpush1.xpose.msra.mxu0 0.0
        %1748 = vmatprep.subr.mxu0 0.0
        %1749 = vmatpush1.xpose.msra.mxu0 0.0
        %1750 = vmatprep.subr.mxu0 0.0
        %1751 = vmatpush1.xpose.msra.mxu0 0.0
        %1752 = vmatprep.subr.mxu0 0.0
        %1753 = vmatpush1.xpose.msra.mxu0 0.0
        %1754 = vmatprep.subr.mxu0 0.0
        %1755 = vmatpush1.xpose.msra.mxu0 0.0
        %1756 = vmatprep.subr.mxu0 0.0
        %1757 = vmatpush1.xpose.msra.mxu0 0.0
        %1758 = vmatprep.subr.mxu0 0.0
        %1759 = vmatpush1.xpose.msra.mxu0 0.0
        %1760 = vmatprep.subr.mxu0 0.0
        %1761 = vmatpush1.xpose.msra.mxu0 0.0
        %1762 = vmatprep.subr.mxu0 0.0
        %1763 = vmatpush1.xpose.msra.mxu0 0.0
        %1764 = vmatprep.subr.mxu0 0.0
        %1765 = vmatpush1.xpose.msra.mxu0 0.0
        %1766 = vmatprep.subr.mxu0 0.0
        %1767 = vmatpush1.xpose.msra.mxu0 0.0
        %1768 = vmatprep.subr.mxu0 0.0
        %1769 = vmatpush1.xpose.msra.mxu0 0.0
        %1770 = vmatprep.subr.mxu0 0.0
        %1771 = vmatpush1.xpose.msra.mxu0 0.0
        %1772 = vmatprep.subr.mxu0 0.0
        %1773 = vmatpush1.xpose.msra.mxu0 0.0
        %1774 = vmatprep.subr.mxu0 0.0
        %1775 = vmatpush1.xpose.msra.mxu0 0.0
        %1776 = vmatprep.subr.mxu0 0.0
        %1777 = vmatpush1.xpose.msra.mxu0 0.0
        %1778 = vmatprep.subr.mxu0 0.0
        %1779 = vmatpush1.xpose.msra.mxu0 0.0
        %1780 = vmatprep.subr.mxu0 0.0
        %1781 = vmatpush1.xpose.msra.mxu0 0.0
        %1782 = vmatprep.subr.mxu0 0.0
        %1783 = vmatpush1.xpose.msra.mxu0 0.0
        %1784 = vmatprep.subr.mxu0 0.0
        %1785 = vmatpush1.xpose.msra.mxu0 0.0
        %1786 = vmatprep.subr.mxu0 0.0
        %1787 = vmatpush1.xpose.msra.mxu0 0.0
        %1788 = vmatprep.subr.mxu0 0.0
        %1789 = vmatpush1.xpose.msra.mxu0 0.0
        %1790 = vmatprep.subr.mxu0 0.0
        %1791 = vmatpush1.xpose.msra.mxu0 0.0
        %1792 = vmatprep.subr.mxu0 0.0
        %1793 = vmatpush1.xpose.msra.mxu0 0.0
        %1794 = vmatprep.subr.mxu0 0.0
        %1795 = vmatpush1.xpose.msra.mxu0 0.0
        %1796 = vmatprep.mubr.f32.mxu0 %v1505
        %1797 = vmatmul.mubr.f32.gmra.mrb[0].mxu0 %v1504
        %v1798 = vpop.f32.mrb[0].mxu0
        %v1799 = vadd.f32 %v1729, %v1798
        %v1800 = vpop.f32.mrb[0].mxu0
        %1801 = vdwg.mxu0
        %1802 = vmatprep.subr.mxu0 %v1483
        %1803 = vmatpush1.xpose.msra.mxu0 %v1482
        %1804 = vmatprep.subr.mxu0 0.0
        %1805 = vmatpush1.xpose.msra.mxu0 0.0
        %1806 = vmatprep.subr.mxu0 0.0
        %1807 = vmatpush1.xpose.msra.mxu0 0.0
        %1808 = vmatprep.subr.mxu0 0.0
        %1809 = vmatpush1.xpose.msra.mxu0 0.0
        %1810 = vmatprep.subr.mxu0 0.0
        %1811 = vmatpush1.xpose.msra.mxu0 0.0
        %1812 = vmatprep.subr.mxu0 0.0
        %1813 = vmatpush1.xpose.msra.mxu0 0.0
        %1814 = vmatprep.subr.mxu0 0.0
        %1815 = vmatpush1.xpose.msra.mxu0 0.0
        %1816 = vmatprep.subr.mxu0 0.0
        %1817 = vmatpush1.xpose.msra.mxu0 0.0
        %1818 = vmatprep.subr.mxu0 0.0
        %1819 = vmatpush1.xpose.msra.mxu0 0.0
        %1820 = vmatprep.subr.mxu0 0.0
        %1821 = vmatpush1.xpose.msra.mxu0 0.0
        %1822 = vmatprep.subr.mxu0 0.0
        %1823 = vmatpush1.xpose.msra.mxu0 0.0
        %1824 = vmatprep.subr.mxu0 0.0
        %1825 = vmatpush1.xpose.msra.mxu0 0.0
        %1826 = vmatprep.subr.mxu0 0.0
        %1827 = vmatpush1.xpose.msra.mxu0 0.0
        %1828 = vmatprep.subr.mxu0 0.0
        %1829 = vmatpush1.xpose.msra.mxu0 0.0
        %1830 = vmatprep.subr.mxu0 0.0
        %1831 = vmatpush1.xpose.msra.mxu0 0.0
        %1832 = vmatprep.subr.mxu0 0.0
        %1833 = vmatpush1.xpose.msra.mxu0 0.0
        %1834 = vmatprep.subr.mxu0 0.0
        %1835 = vmatpush1.xpose.msra.mxu0 0.0
        %1836 = vmatprep.subr.mxu0 0.0
        %1837 = vmatpush1.xpose.msra.mxu0 0.0
        %1838 = vmatprep.subr.mxu0 0.0
        %1839 = vmatpush1.xpose.msra.mxu0 0.0
        %1840 = vmatprep.subr.mxu0 0.0
        %1841 = vmatpush1.xpose.msra.mxu0 0.0
        %1842 = vmatprep.subr.mxu0 0.0
        %1843 = vmatpush1.xpose.msra.mxu0 0.0
        %1844 = vmatprep.subr.mxu0 0.0
        %1845 = vmatpush1.xpose.msra.mxu0 0.0
        %1846 = vmatprep.subr.mxu0 0.0
        %1847 = vmatpush1.xpose.msra.mxu0 0.0
        %1848 = vmatprep.subr.mxu0 0.0
        %1849 = vmatpush1.xpose.msra.mxu0 0.0
        %1850 = vmatprep.subr.mxu0 0.0
        %1851 = vmatpush1.xpose.msra.mxu0 0.0
        %1852 = vmatprep.subr.mxu0 0.0
        %1853 = vmatpush1.xpose.msra.mxu0 0.0
        %1854 = vmatprep.subr.mxu0 0.0
        %1855 = vmatpush1.xpose.msra.mxu0 0.0
        %1856 = vmatprep.subr.mxu0 0.0
        %1857 = vmatpush1.xpose.msra.mxu0 0.0
        %1858 = vmatprep.subr.mxu0 0.0
        %1859 = vmatpush1.xpose.msra.mxu0 0.0
        %1860 = vmatprep.subr.mxu0 0.0
        %1861 = vmatpush1.xpose.msra.mxu0 0.0
        %1862 = vmatprep.subr.mxu0 0.0
        %1863 = vmatpush1.xpose.msra.mxu0 0.0
        %1864 = vmatprep.subr.mxu0 0.0
        %1865 = vmatpush1.xpose.msra.mxu0 0.0
        %1866 = vmatprep.mubr.f32.mxu0 %v1507
        %1867 = vmatmul.mubr.f32.gmra.mrb[0].mxu0 %v1506
        %v1868 = vpop.f32.mrb[0].mxu0
        %v1869 = vadd.f32 %v1799, %v1868
        %v1870 = vpop.f32.mrb[0].mxu0
        %1871 = vdwg.mxu0
        %1872 = vmatprep.subr.mxu0 %v1485
        %1873 = vmatpush1.xpose.msra.mxu0 %v1484
        %1874 = vmatprep.subr.mxu0 0.0
        %1875 = vmatpush1.xpose.msra.mxu0 0.0
        %1876 = vmatprep.subr.mxu0 0.0
        %1877 = vmatpush1.xpose.msra.mxu0 0.0
        %1878 = vmatprep.subr.mxu0 0.0
        %1879 = vmatpush1.xpose.msra.mxu0 0.0
        %1880 = vmatprep.subr.mxu0 0.0
        %1881 = vmatpush1.xpose.msra.mxu0 0.0
        %1882 = vmatprep.subr.mxu0 0.0
        %1883 = vmatpush1.xpose.msra.mxu0 0.0
        %1884 = vmatprep.subr.mxu0 0.0
        %1885 = vmatpush1.xpose.msra.mxu0 0.0
        %1886 = vmatprep.subr.mxu0 0.0
        %1887 = vmatpush1.xpose.msra.mxu0 0.0
        %1888 = vmatprep.subr.mxu0 0.0
        %1889 = vmatpush1.xpose.msra.mxu0 0.0
        %1890 = vmatprep.subr.mxu0 0.0
        %1891 = vmatpush1.xpose.msra.mxu0 0.0
        %1892 = vmatprep.subr.mxu0 0.0
        %1893 = vmatpush1.xpose.msra.mxu0 0.0
        %1894 = vmatprep.subr.mxu0 0.0
        %1895 = vmatpush1.xpose.msra.mxu0 0.0
        %1896 = vmatprep.subr.mxu0 0.0
        %1897 = vmatpush1.xpose.msra.mxu0 0.0
        %1898 = vmatprep.subr.mxu0 0.0
        %1899 = vmatpush1.xpose.msra.mxu0 0.0
        %1900 = vmatprep.subr.mxu0 0.0
        %1901 = vmatpush1.xpose.msra.mxu0 0.0
        %1902 = vmatprep.subr.mxu0 0.0
        %1903 = vmatpush1.xpose.msra.mxu0 0.0
        %1904 = vmatprep.subr.mxu0 0.0
        %1905 = vmatpush1.xpose.msra.mxu0 0.0
        %1906 = vmatprep.subr.mxu0 0.0
        %1907 = vmatpush1.xpose.msra.mxu0 0.0
        %1908 = vmatprep.subr.mxu0 0.0
        %1909 = vmatpush1.xpose.msra.mxu0 0.0
        %1910 = vmatprep.subr.mxu0 0.0
        %1911 = vmatpush1.xpose.msra.mxu0 0.0
        %1912 = vmatprep.subr.mxu0 0.0
        %1913 = vmatpush1.xpose.msra.mxu0 0.0
        %1914 = vmatprep.subr.mxu0 0.0
        %1915 = vmatpush1.xpose.msra.mxu0 0.0
        %1916 = vmatprep.subr.mxu0 0.0
        %1917 = vmatpush1.xpose.msra.mxu0 0.0
        %1918 = vmatprep.subr.mxu0 0.0
        %1919 = vmatpush1.xpose.msra.mxu0 0.0
        %1920 = vmatprep.subr.mxu0 0.0
        %1921 = vmatpush1.xpose.msra.mxu0 0.0
        %1922 = vmatprep.subr.mxu0 0.0
        %1923 = vmatpush1.xpose.msra.mxu0 0.0
        %1924 = vmatprep.subr.mxu0 0.0
        %1925 = vmatpush1.xpose.msra.mxu0 0.0
        %1926 = vmatprep.subr.mxu0 0.0
        %1927 = vmatpush1.xpose.msra.mxu0 0.0
        %1928 = vmatprep.subr.mxu0 0.0
        %1929 = vmatpush1.xpose.msra.mxu0 0.0
        %1930 = vmatprep.subr.mxu0 0.0
        %1931 = vmatpush1.xpose.msra.mxu0 0.0
        %1932 = vmatprep.subr.mxu0 0.0
        %1933 = vmatpush1.xpose.msra.mxu0 0.0
        %1934 = vmatprep.subr.mxu0 0.0
        %1935 = vmatpush1.xpose.msra.mxu0 0.0
        %1936 = vmatprep.mubr.f32.mxu0 %v1509
        %1937 = vmatmul.mubr.f32.gmra.mrb[0].mxu0 %v1508
        %v1938 = vpop.f32.mrb[0].mxu0
        %v1939 = vadd.f32 %v1869, %v1938
        %v1940 = vpop.f32.mrb[0].mxu0
        %1941 = vdwg.mxu0
        %1942 = vmatprep.subr.mxu0 %v1487
        %1943 = vmatpush1.xpose.msra.mxu0 %v1486
        %1944 = vmatprep.subr.mxu0 0.0
        %1945 = vmatpush1.xpose.msra.mxu0 0.0
        %1946 = vmatprep.subr.mxu0 0.0
        %1947 = vmatpush1.xpose.msra.mxu0 0.0
        %1948 = vmatprep.subr.mxu0 0.0
        %1949 = vmatpush1.xpose.msra.mxu0 0.0
        %1950 = vmatprep.subr.mxu0 0.0
        %1951 = vmatpush1.xpose.msra.mxu0 0.0
        %1952 = vmatprep.subr.mxu0 0.0
        %1953 = vmatpush1.xpose.msra.mxu0 0.0
        %1954 = vmatprep.subr.mxu0 0.0
        %1955 = vmatpush1.xpose.msra.mxu0 0.0
        %1956 = vmatprep.subr.mxu0 0.0
        %1957 = vmatpush1.xpose.msra.mxu0 0.0
        %1958 = vmatprep.subr.mxu0 0.0
        %1959 = vmatpush1.xpose.msra.mxu0 0.0
        %1960 = vmatprep.subr.mxu0 0.0
        %1961 = vmatpush1.xpose.msra.mxu0 0.0
        %1962 = vmatprep.subr.mxu0 0.0
        %1963 = vmatpush1.xpose.msra.mxu0 0.0
        %1964 = vmatprep.subr.mxu0 0.0
        %1965 = vmatpush1.xpose.msra.mxu0 0.0
        %1966 = vmatprep.subr.mxu0 0.0
        %1967 = vmatpush1.xpose.msra.mxu0 0.0
        %1968 = vmatprep.subr.mxu0 0.0
        %1969 = vmatpush1.xpose.msra.mxu0 0.0
        %1970 = vmatprep.subr.mxu0 0.0
        %1971 = vmatpush1.xpose.msra.mxu0 0.0
        %1972 = vmatprep.subr.mxu0 0.0
        %1973 = vmatpush1.xpose.msra.mxu0 0.0
        %1974 = vmatprep.subr.mxu0 0.0
        %1975 = vmatpush1.xpose.msra.mxu0 0.0
        %1976 = vmatprep.subr.mxu0 0.0
        %1977 = vmatpush1.xpose.msra.mxu0 0.0
        %1978 = vmatprep.subr.mxu0 0.0
        %1979 = vmatpush1.xpose.msra.mxu0 0.0
        %1980 = vmatprep.subr.mxu0 0.0
        %1981 = vmatpush1.xpose.msra.mxu0 0.0
        %1982 = vmatprep.subr.mxu0 0.0
        %1983 = vmatpush1.xpose.msra.mxu0 0.0
        %1984 = vmatprep.subr.mxu0 0.0
        %1985 = vmatpush1.xpose.msra.mxu0 0.0
        %1986 = vmatprep.subr.mxu0 0.0
        %1987 = vmatpush1.xpose.msra.mxu0 0.0
        %1988 = vmatprep.subr.mxu0 0.0
        %1989 = vmatpush1.xpose.msra.mxu0 0.0
        %1990 = vmatprep.subr.mxu0 0.0
        %1991 = vmatpush1.xpose.msra.mxu0 0.0
        %1992 = vmatprep.subr.mxu0 0.0
        %1993 = vmatpush1.xpose.msra.mxu0 0.0
        %1994 = vmatprep.subr.mxu0 0.0
        %1995 = vmatpush1.xpose.msra.mxu0 0.0
        %1996 = vmatprep.subr.mxu0 0.0
        %1997 = vmatpush1.xpose.msra.mxu0 0.0
        %1998 = vmatprep.subr.mxu0 0.0
        %1999 = vmatpush1.xpose.msra.mxu0 0.0
        %2000 = vmatprep.subr.mxu0 0.0
        %2001 = vmatpush1.xpose.msra.mxu0 0.0
        %2002 = vmatprep.subr.mxu0 0.0
        %2003 = vmatpush1.xpose.msra.mxu0 0.0
        %2004 = vmatprep.subr.mxu0 0.0
        %2005 = vmatpush1.xpose.msra.mxu0 0.0
        %2006 = vmatprep.mubr.f32.mxu0 %v1511
        %2007 = vmatmul.mubr.f32.gmra.mrb[0].mxu0 %v1510
        %v2008 = vpop.f32.mrb[0].mxu0
        %v2009 = vadd.f32 %v1939, %v2008
        %v2010 = vpop.f32.mrb[0].mxu0
        %2011 = vdwg.mxu0
        %2012 = vmatprep.subr.mxu0 %v1489
        %2013 = vmatpush1.xpose.msra.mxu0 %v1488
        %2014 = vmatprep.subr.mxu0 0.0
        %2015 = vmatpush1.xpose.msra.mxu0 0.0
        %2016 = vmatprep.subr.mxu0 0.0
        %2017 = vmatpush1.xpose.msra.mxu0 0.0
        %2018 = vmatprep.subr.mxu0 0.0
        %2019 = vmatpush1.xpose.msra.mxu0 0.0
        %2020 = vmatprep.subr.mxu0 0.0
        %2021 = vmatpush1.xpose.msra.mxu0 0.0
        %2022 = vmatprep.subr.mxu0 0.0
        %2023 = vmatpush1.xpose.msra.mxu0 0.0
        %2024 = vmatprep.subr.mxu0 0.0
        %2025 = vmatpush1.xpose.msra.mxu0 0.0
        %2026 = vmatprep.subr.mxu0 0.0
        %2027 = vmatpush1.xpose.msra.mxu0 0.0
        %2028 = vmatprep.subr.mxu0 0.0
        %2029 = vmatpush1.xpose.msra.mxu0 0.0
        %2030 = vmatprep.subr.mxu0 0.0
        %2031 = vmatpush1.xpose.msra.mxu0 0.0
        %2032 = vmatprep.subr.mxu0 0.0
        %2033 = vmatpush1.xpose.msra.mxu0 0.0
        %2034 = vmatprep.subr.mxu0 0.0
        %2035 = vmatpush1.xpose.msra.mxu0 0.0
        %2036 = vmatprep.subr.mxu0 0.0
        %2037 = vmatpush1.xpose.msra.mxu0 0.0
        %2038 = vmatprep.subr.mxu0 0.0
        %2039 = vmatpush1.xpose.msra.mxu0 0.0
        %2040 = vmatprep.subr.mxu0 0.0
        %2041 = vmatpush1.xpose.msra.mxu0 0.0
        %2042 = vmatprep.subr.mxu0 0.0
        %2043 = vmatpush1.xpose.msra.mxu0 0.0
        %2044 = vmatprep.subr.mxu0 0.0
        %2045 = vmatpush1.xpose.msra.mxu0 0.0
        %2046 = vmatprep.subr.mxu0 0.0
        %2047 = vmatpush1.xpose.msra.mxu0 0.0
        %2048 = vmatprep.subr.mxu0 0.0
        %2049 = vmatpush1.xpose.msra.mxu0 0.0
        %2050 = vmatprep.subr.mxu0 0.0
        %2051 = vmatpush1.xpose.msra.mxu0 0.0
        %2052 = vmatprep.subr.mxu0 0.0
        %2053 = vmatpush1.xpose.msra.mxu0 0.0
        %2054 = vmatprep.subr.mxu0 0.0
        %2055 = vmatpush1.xpose.msra.mxu0 0.0
        %2056 = vmatprep.subr.mxu0 0.0
        %2057 = vmatpush1.xpose.msra.mxu0 0.0
        %2058 = vmatprep.subr.mxu0 0.0
        %2059 = vmatpush1.xpose.msra.mxu0 0.0
        %2060 = vmatprep.subr.mxu0 0.0
        %2061 = vmatpush1.xpose.msra.mxu0 0.0
        %2062 = vmatprep.subr.mxu0 0.0
        %2063 = vmatpush1.xpose.msra.mxu0 0.0
        %2064 = vmatprep.subr.mxu0 0.0
        %2065 = vmatpush1.xpose.msra.mxu0 0.0
        %2066 = vmatprep.subr.mxu0 0.0
        %2067 = vmatpush1.xpose.msra.mxu0 0.0
        %2068 = vmatprep.subr.mxu0 0.0
        %2069 = vmatpush1.xpose.msra.mxu0 0.0
        %2070 = vmatprep.subr.mxu0 0.0
        %2071 = vmatpush1.xpose.msra.mxu0 0.0
        %2072 = vmatprep.subr.mxu0 0.0
        %2073 = vmatpush1.xpose.msra.mxu0 0.0
        %2074 = vmatprep.subr.mxu0 0.0
        %2075 = vmatpush1.xpose.msra.mxu0 0.0
        %2076 = vmatprep.mubr.f32.mxu0 %v1513
        %2077 = vmatmul.mubr.f32.gmra.mrb[0].mxu0 %v1512
        %v2078 = vpop.f32.mrb[0].mxu0
        %v2079 = vadd.f32 %v2009, %v2078
        %v2080 = vpop.f32.mrb[0].mxu0
        %2081 = vdwg.mxu0
        %2082 = vmatprep.subr.mxu0 %v1491
        %2083 = vmatpush1.xpose.msra.mxu0 %v1490
        %2084 = vmatprep.subr.mxu0 0.0
        %2085 = vmatpush1.xpose.msra.mxu0 0.0
        %2086 = vmatprep.subr.mxu0 0.0
        %2087 = vmatpush1.xpose.msra.mxu0 0.0
        %2088 = vmatprep.subr.mxu0 0.0
        %2089 = vmatpush1.xpose.msra.mxu0 0.0
        %2090 = vmatprep.subr.mxu0 0.0
        %2091 = vmatpush1.xpose.msra.mxu0 0.0
        %2092 = vmatprep.subr.mxu0 0.0
        %2093 = vmatpush1.xpose.msra.mxu0 0.0
        %2094 = vmatprep.subr.mxu0 0.0
        %2095 = vmatpush1.xpose.msra.mxu0 0.0
        %2096 = vmatprep.subr.mxu0 0.0
        %2097 = vmatpush1.xpose.msra.mxu0 0.0
        %2098 = vmatprep.subr.mxu0 0.0
        %2099 = vmatpush1.xpose.msra.mxu0 0.0
        %2100 = vmatprep.subr.mxu0 0.0
        %2101 = vmatpush1.xpose.msra.mxu0 0.0
        %2102 = vmatprep.subr.mxu0 0.0
        %2103 = vmatpush1.xpose.msra.mxu0 0.0
        %2104 = vmatprep.subr.mxu0 0.0
        %2105 = vmatpush1.xpose.msra.mxu0 0.0
        %2106 = vmatprep.subr.mxu0 0.0
        %2107 = vmatpush1.xpose.msra.mxu0 0.0
        %2108 = vmatprep.subr.mxu0 0.0
        %2109 = vmatpush1.xpose.msra.mxu0 0.0
        %2110 = vmatprep.subr.mxu0 0.0
        %2111 = vmatpush1.xpose.msra.mxu0 0.0
        %2112 = vmatprep.subr.mxu0 0.0
        %2113 = vmatpush1.xpose.msra.mxu0 0.0
        %2114 = vmatprep.subr.mxu0 0.0
        %2115 = vmatpush1.xpose.msra.mxu0 0.0
        %2116 = vmatprep.subr.mxu0 0.0
        %2117 = vmatpush1.xpose.msra.mxu0 0.0
        %2118 = vmatprep.subr.mxu0 0.0
        %2119 = vmatpush1.xpose.msra.mxu0 0.0
        %2120 = vmatprep.subr.mxu0 0.0
        %2121 = vmatpush1.xpose.msra.mxu0 0.0
        %2122 = vmatprep.subr.mxu0 0.0
        %2123 = vmatpush1.xpose.msra.mxu0 0.0
        %2124 = vmatprep.subr.mxu0 0.0
        %2125 = vmatpush1.xpose.msra.mxu0 0.0
        %2126 = vmatprep.subr.mxu0 0.0
        %2127 = vmatpush1.xpose.msra.mxu0 0.0
        %2128 = vmatprep.subr.mxu0 0.0
        %2129 = vmatpush1.xpose.msra.mxu0 0.0
        %2130 = vmatprep.subr.mxu0 0.0
        %2131 = vmatpush1.xpose.msra.mxu0 0.0
        %2132 = vmatprep.subr.mxu0 0.0
        %2133 = vmatpush1.xpose.msra.mxu0 0.0
        %2134 = vmatprep.subr.mxu0 0.0
        %2135 = vmatpush1.xpose.msra.mxu0 0.0
        %2136 = vmatprep.subr.mxu0 0.0
        %2137 = vmatpush1.xpose.msra.mxu0 0.0
        %2138 = vmatprep.subr.mxu0 0.0
        %2139 = vmatpush1.xpose.msra.mxu0 0.0
        %2140 = vmatprep.subr.mxu0 0.0
        %2141 = vmatpush1.xpose.msra.mxu0 0.0
        %2142 = vmatprep.subr.mxu0 0.0
        %2143 = vmatpush1.xpose.msra.mxu0 0.0
        %2144 = vmatprep.subr.mxu0 0.0
        %2145 = vmatpush1.xpose.msra.mxu0 0.0
        %2146 = vmatprep.mubr.f32.mxu0 %v1515
        %2147 = vmatmul.mubr.f32.gmra.mrb[0].mxu0 %v1514
        %v2148 = vpop.f32.mrb[0].mxu0
        %v2149 = vadd.f32 %v2079, %v2148
        %v2150 = vpop.f32.mrb[0].mxu0
        %2151 = vdwg.mxu0
        %2152 = vmatprep.subr.mxu0 %v1493
        %2153 = vmatpush1.xpose.msra.mxu0 %v1492
        %2154 = vmatprep.subr.mxu0 0.0
        %2155 = vmatpush1.xpose.msra.mxu0 0.0
        %2156 = vmatprep.subr.mxu0 0.0
        %2157 = vmatpush1.xpose.msra.mxu0 0.0
        %2158 = vmatprep.subr.mxu0 0.0
        %2159 = vmatpush1.xpose.msra.mxu0 0.0
        %2160 = vmatprep.subr.mxu0 0.0
        %2161 = vmatpush1.xpose.msra.mxu0 0.0
        %2162 = vmatprep.subr.mxu0 0.0
        %2163 = vmatpush1.xpose.msra.mxu0 0.0
        %2164 = vmatprep.subr.mxu0 0.0
        %2165 = vmatpush1.xpose.msra.mxu0 0.0
        %2166 = vmatprep.subr.mxu0 0.0
        %2167 = vmatpush1.xpose.msra.mxu0 0.0
        %2168 = vmatprep.subr.mxu0 0.0
        %2169 = vmatpush1.xpose.msra.mxu0 0.0
        %2170 = vmatprep.subr.mxu0 0.0
        %2171 = vmatpush1.xpose.msra.mxu0 0.0
        %2172 = vmatprep.subr.mxu0 0.0
        %2173 = vmatpush1.xpose.msra.mxu0 0.0
        %2174 = vmatprep.subr.mxu0 0.0
        %2175 = vmatpush1.xpose.msra.mxu0 0.0
        %2176 = vmatprep.subr.mxu0 0.0
        %2177 = vmatpush1.xpose.msra.mxu0 0.0
        %2178 = vmatprep.subr.mxu0 0.0
        %2179 = vmatpush1.xpose.msra.mxu0 0.0
        %2180 = vmatprep.subr.mxu0 0.0
        %2181 = vmatpush1.xpose.msra.mxu0 0.0
        %2182 = vmatprep.subr.mxu0 0.0
        %2183 = vmatpush1.xpose.msra.mxu0 0.0
        %2184 = vmatprep.subr.mxu0 0.0
        %2185 = vmatpush1.xpose.msra.mxu0 0.0
        %2186 = vmatprep.subr.mxu0 0.0
        %2187 = vmatpush1.xpose.msra.mxu0 0.0
        %2188 = vmatprep.subr.mxu0 0.0
        %2189 = vmatpush1.xpose.msra.mxu0 0.0
        %2190 = vmatprep.subr.mxu0 0.0
        %2191 = vmatpush1.xpose.msra.mxu0 0.0
        %2192 = vmatprep.subr.mxu0 0.0
        %2193 = vmatpush1.xpose.msra.mxu0 0.0
        %2194 = vmatprep.subr.mxu0 0.0
        %2195 = vmatpush1.xpose.msra.mxu0 0.0
        %2196 = vmatprep.subr.mxu0 0.0
        %2197 = vmatpush1.xpose.msra.mxu0 0.0
        %2198 = vmatprep.subr.mxu0 0.0
        %2199 = vmatpush1.xpose.msra.mxu0 0.0
        %2200 = vmatprep.subr.mxu0 0.0
        %2201 = vmatpush1.xpose.msra.mxu0 0.0
        %2202 = vmatprep.subr.mxu0 0.0
        %2203 = vmatpush1.xpose.msra.mxu0 0.0
        %2204 = vmatprep.subr.mxu0 0.0
        %2205 = vmatpush1.xpose.msra.mxu0 0.0
        %2206 = vmatprep.subr.mxu0 0.0
        %2207 = vmatpush1.xpose.msra.mxu0 0.0
        %2208 = vmatprep.subr.mxu0 0.0
        %2209 = vmatpush1.xpose.msra.mxu0 0.0
        %2210 = vmatprep.subr.mxu0 0.0
        %2211 = vmatpush1.xpose.msra.mxu0 0.0
        %2212 = vmatprep.subr.mxu0 0.0
        %2213 = vmatpush1.xpose.msra.mxu0 0.0
        %2214 = vmatprep.subr.mxu0 0.0
        %2215 = vmatpush1.xpose.msra.mxu0 0.0
        %2216 = vmatprep.mubr.f32.mxu0 %v1517
        %2217 = vmatmul.mubr.f32.gmra.mrb[0].mxu0 %v1516
        %v2218 = vpop.f32.mrb[0].mxu0
        %v2219 = vadd.f32 %v2149, %v2218
        %v2220 = vpop.f32.mrb[0].mxu0
        %2221 = vdwg.mxu0
        %2222 = vmatprep.subr.mxu0 %v1495
        %2223 = vmatpush1.xpose.msra.mxu0 %v1494
        %2224 = vmatprep.subr.mxu0 0.0
        %2225 = vmatpush1.xpose.msra.mxu0 0.0
        %2226 = vmatprep.subr.mxu0 0.0
        %2227 = vmatpush1.xpose.msra.mxu0 0.0
        %2228 = vmatprep.subr.mxu0 0.0
        %2229 = vmatpush1.xpose.msra.mxu0 0.0
        %2230 = vmatprep.subr.mxu0 0.0
        %2231 = vmatpush1.xpose.msra.mxu0 0.0
        %2232 = vmatprep.subr.mxu0 0.0
        %2233 = vmatpush1.xpose.msra.mxu0 0.0
        %2234 = vmatprep.subr.mxu0 0.0
        %2235 = vmatpush1.xpose.msra.mxu0 0.0
        %2236 = vmatprep.subr.mxu0 0.0
        %2237 = vmatpush1.xpose.msra.mxu0 0.0
        %2238 = vmatprep.subr.mxu0 0.0
        %2239 = vmatpush1.xpose.msra.mxu0 0.0
        %2240 = vmatprep.subr.mxu0 0.0
        %2241 = vmatpush1.xpose.msra.mxu0 0.0
        %2242 = vmatprep.subr.mxu0 0.0
        %2243 = vmatpush1.xpose.msra.mxu0 0.0
        %2244 = vmatprep.subr.mxu0 0.0
        %2245 = vmatpush1.xpose.msra.mxu0 0.0
        %2246 = vmatprep.subr.mxu0 0.0
        %2247 = vmatpush1.xpose.msra.mxu0 0.0
        %2248 = vmatprep.subr.mxu0 0.0
        %2249 = vmatpush1.xpose.msra.mxu0 0.0
        %2250 = vmatprep.subr.mxu0 0.0
        %2251 = vmatpush1.xpose.msra.mxu0 0.0
        %2252 = vmatprep.subr.mxu0 0.0
        %2253 = vmatpush1.xpose.msra.mxu0 0.0
        %2254 = vmatprep.subr.mxu0 0.0
        %2255 = vmatpush1.xpose.msra.mxu0 0.0
        %2256 = vmatprep.subr.mxu0 0.0
        %2257 = vmatpush1.xpose.msra.mxu0 0.0
        %2258 = vmatprep.subr.mxu0 0.0
        %2259 = vmatpush1.xpose.msra.mxu0 0.0
        %2260 = vmatprep.subr.mxu0 0.0
        %2261 = vmatpush1.xpose.msra.mxu0 0.0
        %2262 = vmatprep.subr.mxu0 0.0
        %2263 = vmatpush1.xpose.msra.mxu0 0.0
        %2264 = vmatprep.subr.mxu0 0.0
        %2265 = vmatpush1.xpose.msra.mxu0 0.0
        %2266 = vmatprep.subr.mxu0 0.0
        %2267 = vmatpush1.xpose.msra.mxu0 0.0
        %2268 = vmatprep.subr.mxu0 0.0
        %2269 = vmatpush1.xpose.msra.mxu0 0.0
        %2270 = vmatprep.subr.mxu0 0.0
        %2271 = vmatpush1.xpose.msra.mxu0 0.0
        %2272 = vmatprep.subr.mxu0 0.0
        %2273 = vmatpush1.xpose.msra.mxu0 0.0
        %2274 = vmatprep.subr.mxu0 0.0
        %2275 = vmatpush1.xpose.msra.mxu0 0.0
        %2276 = vmatprep.subr.mxu0 0.0
        %2277 = vmatpush1.xpose.msra.mxu0 0.0
        %2278 = vmatprep.subr.mxu0 0.0
        %2279 = vmatpush1.xpose.msra.mxu0 0.0
        %2280 = vmatprep.subr.mxu0 0.0
        %2281 = vmatpush1.xpose.msra.mxu0 0.0
        %2282 = vmatprep.subr.mxu0 0.0
        %2283 = vmatpush1.xpose.msra.mxu0 0.0
        %2284 = vmatprep.subr.mxu0 0.0
        %2285 = vmatpush1.xpose.msra.mxu0 0.0
        %2286 = vmatprep.mubr.f32.mxu0 %v1519
        %2287 = vmatmul.mubr.f32.gmra.mrb[0].mxu0 %v1518
        %v2288 = vpop.f32.mrb[0].mxu0
        %v2289 = vadd.f32 %v2219, %v2288
        %v2290 = vpop.f32.mrb[0].mxu0
        %2291 = vdwg.mxu0
        %2292 = vmatprep.subr.mxu0 %v1497
        %2293 = vmatpush1.xpose.msra.mxu0 %v1496
        %2294 = vmatprep.subr.mxu0 0.0
        %2295 = vmatpush1.xpose.msra.mxu0 0.0
        %2296 = vmatprep.subr.mxu0 0.0
        %2297 = vmatpush1.xpose.msra.mxu0 0.0
        %2298 = vmatprep.subr.mxu0 0.0
        %2299 = vmatpush1.xpose.msra.mxu0 0.0
        %2300 = vmatprep.subr.mxu0 0.0
        %2301 = vmatpush1.xpose.msra.mxu0 0.0
        %2302 = vmatprep.subr.mxu0 0.0
        %2303 = vmatpush1.xpose.msra.mxu0 0.0
        %2304 = vmatprep.subr.mxu0 0.0
        %2305 = vmatpush1.xpose.msra.mxu0 0.0
        %2306 = vmatprep.subr.mxu0 0.0
        %2307 = vmatpush1.xpose.msra.mxu0 0.0
        %2308 = vmatprep.subr.mxu0 0.0
        %2309 = vmatpush1.xpose.msra.mxu0 0.0
        %2310 = vmatprep.subr.mxu0 0.0
        %2311 = vmatpush1.xpose.msra.mxu0 0.0
        %2312 = vmatprep.subr.mxu0 0.0
        %2313 = vmatpush1.xpose.msra.mxu0 0.0
        %2314 = vmatprep.subr.mxu0 0.0
        %2315 = vmatpush1.xpose.msra.mxu0 0.0
        %2316 = vmatprep.subr.mxu0 0.0
        %2317 = vmatpush1.xpose.msra.mxu0 0.0
        %2318 = vmatprep.subr.mxu0 0.0
        %2319 = vmatpush1.xpose.msra.mxu0 0.0
        %2320 = vmatprep.subr.mxu0 0.0
        %2321 = vmatpush1.xpose.msra.mxu0 0.0
        %2322 = vmatprep.subr.mxu0 0.0
        %2323 = vmatpush1.xpose.msra.mxu0 0.0
        %2324 = vmatprep.subr.mxu0 0.0
        %2325 = vmatpush1.xpose.msra.mxu0 0.0
        %2326 = vmatprep.subr.mxu0 0.0
        %2327 = vmatpush1.xpose.msra.mxu0 0.0
        %2328 = vmatprep.subr.mxu0 0.0
        %2329 = vmatpush1.xpose.msra.mxu0 0.0
        %2330 = vmatprep.subr.mxu0 0.0
        %2331 = vmatpush1.xpose.msra.mxu0 0.0
        %2332 = vmatprep.subr.mxu0 0.0
        %2333 = vmatpush1.xpose.msra.mxu0 0.0
        %2334 = vmatprep.subr.mxu0 0.0
        %2335 = vmatpush1.xpose.msra.mxu0 0.0
        %2336 = vmatprep.subr.mxu0 0.0
        %2337 = vmatpush1.xpose.msra.mxu0 0.0
        %2338 = vmatprep.subr.mxu0 0.0
        %2339 = vmatpush1.xpose.msra.mxu0 0.0
        %2340 = vmatprep.subr.mxu0 0.0
        %2341 = vmatpush1.xpose.msra.mxu0 0.0
        %2342 = vmatprep.subr.mxu0 0.0
        %2343 = vmatpush1.xpose.msra.mxu0 0.0
        %2344 = vmatprep.subr.mxu0 0.0
        %2345 = vmatpush1.xpose.msra.mxu0 0.0
        %2346 = vmatprep.subr.mxu0 0.0
        %2347 = vmatpush1.xpose.msra.mxu0 0.0
        %2348 = vmatprep.subr.mxu0 0.0
        %2349 = vmatpush1.xpose.msra.mxu0 0.0
        %2350 = vmatprep.subr.mxu0 0.0
        %2351 = vmatpush1.xpose.msra.mxu0 0.0
        %2352 = vmatprep.subr.mxu0 0.0
        %2353 = vmatpush1.xpose.msra.mxu0 0.0
        %2354 = vmatprep.subr.mxu0 0.0
        %2355 = vmatpush1.xpose.msra.mxu0 0.0
        %2356 = vmatprep.mubr.f32.mxu0 %v1521
        %2357 = vmatmul.mubr.f32.gmra.mrb[0].mxu0 %v1520
        %v2358 = vpop.f32.mrb[0].mxu0
        %v2359 = vadd.f32 %v2289, %v2358
        %v2360 = vpop.f32.mrb[0].mxu0
        %2361 = vdwg.mxu0
        %v2362 = vld [vmem:[%s4] sm:$0xff]
        %v2363 = vld [vmem:[%s5] sm:$0x1]
        %v2365 = vlaneseq
        %v2366 = vshrl.u32 %v2365, 7
        %v2367 = vsub.s32 0, %v2366
        %v2368 = vrot.slane %v2363, %v2367
        %vm2370 = vcmask 64512
        %v2372 = vsel %vm2370, %v2359, 0
        %2374 = vmatprep.subr.mxu0 0.0
        %2375 = vmatpush1.msra.mxu0 %v2362
        %2376 = vmatprep.subr.mxu0 0.0
        %2377 = vmatpush1.msra.mxu0 0.0
        %2378 = vmatprep.subr.mxu0 0.0
        %2379 = vmatpush1.msra.mxu0 0.0
        %2380 = vmatprep.subr.mxu0 0.0
        %2381 = vmatpush1.msra.mxu0 0.0
        %2382 = vmatprep.subr.mxu0 0.0
        %2383 = vmatpush1.msra.mxu0 0.0
        %2384 = vmatprep.subr.mxu0 0.0
        %2385 = vmatpush1.msra.mxu0 0.0
        %2386 = vmatprep.subr.mxu0 0.0
        %2387 = vmatpush1.msra.mxu0 0.0
        %2388 = vmatprep.subr.mxu0 0.0
        %2389 = vmatpush1.msra.mxu0 0.0
        %2390 = vmatprep.subr.mxu0 0.0
        %2391 = vmatpush1.msra.mxu0 0.0
        %2392 = vmatprep.subr.mxu0 0.0
        %2393 = vmatpush1.msra.mxu0 0.0
        %2394 = vmatprep.subr.mxu0 0.0
        %2395 = vmatpush1.msra.mxu0 0.0
        %2396 = vmatprep.subr.mxu0 0.0
        %2397 = vmatpush1.msra.mxu0 0.0
        %2398 = vmatprep.subr.mxu0 0.0
        %2399 = vmatpush1.msra.mxu0 0.0
        %2400 = vmatprep.subr.mxu0 0.0
        %2401 = vmatpush1.msra.mxu0 0.0
        %2402 = vmatprep.subr.mxu0 0.0
        %2403 = vmatpush1.msra.mxu0 0.0
        %2404 = vmatprep.subr.mxu0 0.0
        %2405 = vmatpush1.msra.mxu0 0.0
        %2406 = vmatprep.subr.mxu0 0.0
        %2407 = vmatpush1.msra.mxu0 0.0
        %2408 = vmatprep.subr.mxu0 0.0
        %2409 = vmatpush1.msra.mxu0 0.0
        %2410 = vmatprep.subr.mxu0 0.0
        %2411 = vmatpush1.msra.mxu0 0.0
        %2412 = vmatprep.subr.mxu0 0.0
        %2413 = vmatpush1.msra.mxu0 0.0
        %2414 = vmatprep.subr.mxu0 0.0
        %2415 = vmatpush1.msra.mxu0 0.0
        %2416 = vmatprep.subr.mxu0 0.0
        %2417 = vmatpush1.msra.mxu0 0.0
        %2418 = vmatprep.subr.mxu0 0.0
        %2419 = vmatpush1.msra.mxu0 0.0
        %2420 = vmatprep.subr.mxu0 0.0
        %2421 = vmatpush1.msra.mxu0 0.0
        %2422 = vmatprep.subr.mxu0 0.0
        %2423 = vmatpush1.msra.mxu0 0.0
        %2424 = vmatprep.subr.mxu0 0.0
        %2425 = vmatpush1.msra.mxu0 0.0
        %2426 = vmatprep.subr.mxu0 0.0
        %2427 = vmatpush1.msra.mxu0 0.0
        %2428 = vmatprep.subr.mxu0 0.0
        %2429 = vmatpush1.msra.mxu0 0.0
        %2430 = vmatprep.subr.mxu0 0.0
        %2431 = vmatpush1.msra.mxu0 0.0
        %2432 = vmatprep.subr.mxu0 0.0
        %2433 = vmatpush1.msra.mxu0 0.0
        %2434 = vmatprep.subr.mxu0 0.0
        %2435 = vmatpush1.msra.mxu0 0.0
        %2436 = vmatprep.subr.mxu0 0.0
        %2437 = vmatpush1.msra.mxu0 0.0
        %2438 = vmatprep.mubr.f32.mxu0 0.0
        %2439 = vmatmul.mubr.f32.gmra.mrb[0].mxu0 %v2372
        %v2440 = vpop.f32.mrb[0].mxu0
        %v2441 = vadd.f32 %v2368, %v2440
        %v2442 = vpop.f32.mrb[0].mxu0
        %2443 = vdwg.mxu0
        %2444 = vst [vmem:[%s244] sm:$0xff] %v2441
        %s2445 = sand.u32 %s159, 1
        %s2446 = scalar_lea.sflag [#allocation3], %s2445
        %s2447 = sand.u32 %s159, 1
        %s2448 = smul.addr %s2447, 8
        %s2449 = scalar_lea.vmem [#allocation2], %s2448
        // Predicated region
        $region45: #{revnet_forward.1} parent=43 // pred_check
          %p2450 = pneg %p169
        $region46: #{revnet_forward.1} parent=43 // pred_check_branch
          %2452 = sbr.rel (%p2450) target = $region48
        $region47: #{revnet_forward.1} parent=43 // pred_region
          %s2454 = ssub.s32 128, 128
          %2455 = vsyncadd %s2446, %s2454
          %s2456 = smul.addr %s20, 128
          %s2457 = scalar_lea.hbm %s6, %s2456
          %s2459 = sshll.u32 %s2449, 4
          %s2460 = int_to_ptr.vmem [resolvable:$true] %s2459
          %2462 = dma.vmem_to_hbm [thread:$0]  %s2460, 128, %s2457, %s2446
        $region48: #{revnet_forward.1} parent=43 // pred_fallthru
          _
      $region44: #{revnet_forward.1} parent=5 // pred_fallthru
        _
      %p2463 = scmp.le.s32.totalorder 2, %s15
      // Predicated region
      $region49: #{revnet_forward.1} parent=5 // pred_check
        %p2464 = pneg %p2463
      $region50: #{revnet_forward.1} parent=5 // pred_check_branch
        %2466 = sbr.rel (%p2464) target = $region52
      $region51: #{revnet_forward.1} parent=5 // pred_region
        %s2467 = ssub.s32 %s15, 2
        // Predicated region
        $region53: #{revnet_forward.1} parent=51 // pred_check
          %p2468 = pneg %p175
        $region54: #{revnet_forward.1} parent=51 // pred_check_branch
          %2470 = sbr.rel (%p2468) target = $region56
        $region55: #{revnet_forward.1} parent=51 // pred_region
          %s2471 = sand.u32 %s160, 1
          %s2472 = scalar_lea.sflag [#allocation3], %s2471
          %s2473 = sand.u32 %s160, 1
          %s2474 = smul.addr %s2473, 8
          %s2475 = scalar_lea.vmem [#allocation2], %s2474
          %2476 = dma.done %s2472, 128
        $region56: #{revnet_forward.1} parent=51 // pred_fallthru
          _
      $region52: #{revnet_forward.1} parent=5 // pred_fallthru
        _
    $region6: #{revnet_forward.1} parent=1 // loop_footer
      %s19 = sadd.s32 1, %s15
    $region7: #{revnet_forward.1} parent=1 // loop_footer_branch
      %14 = sbr.rel target = $region3
    $region8: #{revnet_forward.1} parent=1 // loop_exit
      _
    %2477 = vsyncpa [#allocation3], 1
    %s2478 = scalar_lea.sflag [#allocation3], 1
    %2479 = vsyncpa %s2478, 1

</llo_original>
